<compile_context>
chip_gen: v6e
topology: v6e:2x2x1
jax: 0.10.0
libtpu: 0.0.40
codegen_flags: <defaults>
</compile_context>

<pallas_src>
import functools

import jax
import jax.numpy as jnp
from jax.experimental import pallas as pl
from jax.experimental.pallas import tpu as pltpu

BN_EPS = 1e-5
LANE = 128
SUBLANE = 8
# bf16 operands for every MXU matmul (accumulation stays f32 via
# preferred_element_type); VPU/EUP math (BN, rsqrt, ReLU) stays f32.
MXU_DTYPE = jnp.bfloat16


def _round_up(n, m):
    return ((n + m - 1) // m) * m


def _full_spec(shape):
    nd = len(shape)
    return pl.BlockSpec(shape, lambda *_, _nd=nd: (0,) * _nd)


def _pallas(kernel, out_shape, *args):
    return pl.pallas_call(
        kernel,
        out_shape=out_shape,
        in_specs=[_full_spec(a.shape) for a in args],
        out_specs=_full_spec(out_shape.shape),
        compiler_params=pltpu.CompilerParams(vmem_limit_bytes=32 * 1024 * 1024),
    )(*args)


# ----------------------------- Pallas kernels ------------------------------

def conv_bn_relu_pool_kernel(p_ref, w_ref, g_ref, beta_ref, o_ref, *, m_valid, m_pad):
    # p_ref : [Kp, 4*Mp] bf16 im2col patches; the 4 2x2-pool-window corners are
    #         concatenated along the lane axis (corner c -> cols [c*Mp,(c+1)*Mp)).
    #         Padded K rows / M cols are zero.
    # w_ref : [Cout, Kp]  conv weight, K flattened as (kh, kw, Cin), zero-padded.
    # g/beta: [Cout, 1]   BatchNorm2d affine params (f32).
    # o_ref : [Cout, Mp]  pooled output (f32); cols >= m_valid are don't-care.
    # One long MXU stream over all 4 corners.
    y = jnp.dot(w_ref[...], p_ref[...], preferred_element_type=jnp.float32)

    # Train-mode BatchNorm2d stats over all B*Hconv*Wconv conv outputs (= the 4
    # corners = 4*m_valid elements per channel). One-pass sum / sum-of-squares;
    # zero-padded columns contribute 0, dividing by the true count keeps stats
    # exact. Conv bias omitted: exactly cancelled by the mean subtraction.
    n = 4.0 * m_valid
    mean = jnp.sum(y, axis=1, keepdims=True) / n                 # [Cout, 1]
    var = jnp.sum(y * y, axis=1, keepdims=True) / n - mean * mean
    scale = g_ref[...] * jax.lax.rsqrt(var + BN_EPS)             # [Cout, 1]
    shift = beta_ref[...] - mean * scale                         # [Cout, 1]

    # BN affine + ReLU + MaxPool2d(2): streaming max over the 4 corner slices.
    acc = jnp.maximum(y[:, 0:m_pad] * scale + shift, 0.0)
    for c in range(1, 4):
        z = jnp.maximum(y[:, c * m_pad:(c + 1) * m_pad] * scale + shift, 0.0)
        acc = jnp.maximum(acc, z)
    o_ref[...] = acc


def fc_stack_kernel(x_ref, w1_ref, b1_ref, w2_ref, b2_ref, w3_ref, b3_ref, o_ref):
    # fc1 -> fc2 -> fc3, no activations (as in the module). All operands are
    # zero-padded to sublane/lane-aligned shapes, so every load/store is
    # unmasked; accumulation is f32, operands bf16.
    h = jnp.dot(x_ref[...], w1_ref[...], preferred_element_type=jnp.float32) + b1_ref[...]
    h = jnp.dot(h.astype(w2_ref.dtype), w2_ref[...],
                preferred_element_type=jnp.float32) + b2_ref[...]
    o_ref[...] = jnp.dot(h.astype(w3_ref.dtype), w3_ref[...],
                         preferred_element_type=jnp.float32) + b3_ref[...]


# ------------------------------- JAX glue ----------------------------------

def _im2col_corners(x, k, k_pad, m_pad):
    """x: [B,H,W,C] NHWC. Returns one [k_pad, 4*m_pad] patch matrix (the four
    2x2-maxpool-window corners concatenated along the lane axis), each corner a
    [K, M] im2col block with K flattened in (kh, kw, C) order and M flattened
    in (b, hp, wp) order, zero-padded to (k_pad, m_pad). Also returns geometry."""
    B, H, W, C = x.shape
    Hp, Wp = (H - k + 1) // 2, (W - k + 1) // 2
    K, M = k * k * C, B * Hp * Wp
    corners = []
    for ph in range(2):
        for pw in range(2):
            cols = [x[:, ph + kh: ph + kh + 2 * Hp: 2,
                       pw + kw: pw + kw + 2 * Wp: 2, :]           # [B, Hp, Wp, C]
                    for kh in range(k) for kw in range(k)]
            p = jnp.stack(cols, axis=0)                           # [k*k, B, Hp, Wp, C]
            p = jnp.transpose(p, (0, 4, 1, 2, 3)).reshape(K, M)   # [K, M]
            corners.append(jnp.pad(p, ((0, k_pad - K), (0, m_pad - M))))
    return jnp.concatenate(corners, axis=1).astype(MXU_DTYPE), (B, Hp, Wp, M)


def _conv_stage(x_nhwc, w_mat, gamma, beta, k):
    # x: [B, H, W, Cin]; w_mat: [Cout, Kp] pre-packed, lane-padded conv weight.
    Cout, Kp = w_mat.shape
    B, H, W, _ = x_nhwc.shape
    Mp = _round_up(B * ((H - k + 1) // 2) * ((W - k + 1) // 2), LANE)
    patches, (B, Hp, Wp, M) = _im2col_corners(x_nhwc, k, Kp, Mp)
    kernel = functools.partial(conv_bn_relu_pool_kernel, m_valid=float(M), m_pad=Mp)
    out = _pallas(kernel, jax.ShapeDtypeStruct((Cout, Mp), jnp.float32),
                  patches, w_mat, gamma, beta)
    # Padded columns hold ReLU(shift) != 0 — slice them off before any reshape.
    return out[:, :M], (B, Hp, Wp)


def pack_params(params):
    """Parameter-only prep (transpose / flatten / lane padding), hoisted out of
    the per-forward path: call once per parameter update, not per step."""
    def conv_w(w):
        Cout, Cin, kh, kw = w.shape
        K = kh * kw * Cin
        m = jnp.transpose(w, (0, 2, 3, 1)).reshape(Cout, K)       # (kh,kw,Cin) order
        return jnp.pad(m, ((0, 0), (0, _round_up(K, 16) - K))).astype(MXU_DTYPE)

    def bn(v):
        return v.reshape(-1, 1).astype(jnp.float32)

    def fc_w(w, rows, cols):
        return jnp.pad(w, ((0, rows - w.shape[0]),
                           (0, cols - w.shape[1]))).astype(MXU_DTYPE)

    def fc_b(b, cols):
        return jnp.pad(b.reshape(1, -1),
                       ((0, 0), (0, cols - b.shape[0]))).astype(jnp.float32)

    k_fc = _round_up(params["fc1_w"].shape[0], LANE)   # 400 -> 512
    n1 = _round_up(params["fc1_w"].shape[1], LANE)     # 120 -> 128
    n2 = _round_up(params["fc2_w"].shape[1], LANE)     # 84  -> 128
    n3 = _round_up(params["fc3_w"].shape[1], LANE)     # 10  -> 128
    return {
        "c1_w": conv_w(params["conv1_w"]), "c1_g": bn(params["bn1_g"]), "c1_b": bn(params["bn1_b"]),
        "c2_w": conv_w(params["conv2_w"]), "c2_g": bn(params["bn2_g"]), "c2_b": bn(params["bn2_b"]),
        "fc1_w": fc_w(params["fc1_w"], k_fc, n1), "fc1_b": fc_b(params["fc1_b"], n1),
        "fc2_w": fc_w(params["fc2_w"], n1, n2), "fc2_b": fc_b(params["fc2_b"], n2),
        "fc3_w": fc_w(params["fc3_w"], n2, n3), "fc3_b": fc_b(params["fc3_b"], n3),
    }


def lenet_forward(x_nchw, pp, *, num_classes):
    x = jnp.transpose(x_nchw, (0, 2, 3, 1)).astype(jnp.float32)       # NCHW -> NHWC

    # Stage 1: conv1(5x5, 3->6) + bn1 + relu + pool(2)   -> [6, B*14*14]
    y1, (B, H1, W1) = _conv_stage(x, pp["c1_w"], pp["c1_g"], pp["c1_b"], k=5)
    x2 = jnp.transpose(y1.reshape(y1.shape[0], B, H1, W1), (1, 2, 3, 0))   # [B,14,14,6]

    # Stage 2: conv2(5x5, 6->16) + bn2 + relu + pool(2)  -> [16, B*5*5]
    y2, (_, H2, W2) = _conv_stage(x2, pp["c2_w"], pp["c2_g"], pp["c2_b"], k=5)

    # Flatten per sample in (C, H, W) order == PyTorch x.reshape(b, -1).
    feats = jnp.transpose(y2.reshape(y2.shape[0], B, H2 * W2),
                          (1, 0, 2)).reshape(B, y2.shape[0] * H2 * W2)

    # FC stack: batch padded to a full 8-row sublane, K/N lane-aligned (zeros).
    Bp = _round_up(B, SUBLANE)
    k_fc = pp["fc1_w"].shape[0]
    x_fc = jnp.pad(feats, ((0, Bp - B), (0, k_fc - feats.shape[1]))).astype(MXU_DTYPE)
    logits_pad = _pallas(
        fc_stack_kernel,
        jax.ShapeDtypeStruct((Bp, pp["fc3_w"].shape[1]), jnp.float32),
        x_fc,
        pp["fc1_w"], pp["fc1_b"],
        pp["fc2_w"], pp["fc2_b"],
        pp["fc3_w"], pp["fc3_b"],
    )
    return logits_pad[:B, :num_classes]


# ------------------------- deterministic parameters -------------------------

def init_params(key, num_classes=10):
    ks = jax.random.split(key, 10)

    def u(k, shape, fan_in):
        bound = float(fan_in) ** -0.5
        return jax.random.uniform(k, shape, jnp.float32, -bound, bound)

    p = {}
    p["conv1_w"] = u(ks[0], (6, 3, 5, 5), 3 * 25)        # [Cout, Cin, kh, kw]
    p["conv1_b"] = u(ks[1], (6,), 3 * 25)                # unused: cancelled by train-mode BN mean
    p["bn1_g"] = jnp.ones((6,), jnp.float32)
    p["bn1_b"] = jnp.zeros((6,), jnp.float32)
    p["conv2_w"] = u(ks[2], (16, 6, 5, 5), 6 * 25)
    p["conv2_b"] = u(ks[3], (16,), 6 * 25)               # unused: cancelled by train-mode BN mean
    p["bn2_g"] = jnp.ones((16,), jnp.float32)
    p["bn2_b"] = jnp.zeros((16,), jnp.float32)
    p["fc1_w"] = u(ks[4], (16 * 5 * 5, 120), 16 * 5 * 5)  # stored as [in, out]
    p["fc1_b"] = u(ks[5], (120,), 16 * 5 * 5)
    p["fc2_w"] = u(ks[6], (120, 84), 120)
    p["fc2_b"] = u(ks[7], (84,), 120)
    p["fc3_w"] = u(ks[8], (84, num_classes), 84)
    p["fc3_b"] = u(ks[9], (num_classes,), 84)
    return p


if __name__ == "__main__":
    key = jax.random.PRNGKey(0)
    pkey, xkey = jax.random.split(key)
    params = init_params(pkey, num_classes=10)
    packed = pack_params(params)          # hoisted: per-update, not per-forward
    # LeNet geometry requires 32x32 spatial input (16*5*5 = 400 flat features).
    x = jax.random.normal(xkey, (2, 3, 32, 32), jnp.float32)    # NCHW like PyTorch
    fwd = jax.jit(functools.partial(lenet_forward, num_classes=10))
    out = fwd(x, packed)
    out = jax.block_until_ready(out)
    assert out.shape == (2, 10) and out.dtype == jnp.float32
    print("KERNEL_OK")
</pallas_src>

<mosaic_0001>
module attributes {stable_mosaic.version = 11 : i64} {
  func.func @conv_bn_relu_pool_kernel(%arg0: memref<80x2048xbf16, #tpu.memory_space<vmem>>, %arg1: memref<6x80xbf16, #tpu.memory_space<vmem>>, %arg2: memref<6x1xf32, #tpu.memory_space<vmem>>, %arg3: memref<6x1xf32, #tpu.memory_space<vmem>>, %arg4: memref<6x512xf32, #tpu.memory_space<vmem>>) attributes {dimension_semantics = [], scalar_prefetch = 0 : i64, scratch_operands = 0 : i64, tpu.core_type = #tpu.core_type<tc>} {
    %c0 = arith.constant 0 : index
    %c0_0 = arith.constant 0 : index
    %0 = vector.load %arg1[%c0, %c0_0] : memref<6x80xbf16, #tpu.memory_space<vmem>>, vector<6x80xbf16>
    %c0_1 = arith.constant 0 : index
    %c0_2 = arith.constant 0 : index
    %1 = vector.load %arg0[%c0_1, %c0_2] : memref<80x2048xbf16, #tpu.memory_space<vmem>>, vector<80x2048xbf16>
    %cst = arith.constant dense<0.000000e+00> : vector<6x2048xf32>
    %2 = tpu.matmul %0, %1, %cst {dimension_numbers = #tpu.dot_dimension_numbers<[1], [0], [0], [1], [0, 0, 1, 1], [], []>} : vector<6x80xbf16>, vector<80x2048xbf16>, vector<6x2048xf32> -> vector<6x2048xf32>
    %cst_3 = arith.constant dense<0.000000e+00> : vector<6xf32>
    %3 = vector.multi_reduction <add>, %2, %cst_3 [1] : vector<6x2048xf32> to vector<6xf32>
    %4 = vector.shape_cast %3 : vector<6xf32> to vector<6x1xf32>
    %cst_4 = arith.constant 1.568000e+03 : f32
    %5 = vector.broadcast %cst_4 : f32 to vector<6x1xf32>
    %6 = arith.divf %4, %5 : vector<6x1xf32>
    %7 = arith.mulf %2, %2 : vector<6x2048xf32>
    %cst_5 = arith.constant dense<0.000000e+00> : vector<6xf32>
    %8 = vector.multi_reduction <add>, %7, %cst_5 [1] : vector<6x2048xf32> to vector<6xf32>
    %9 = vector.shape_cast %8 : vector<6xf32> to vector<6x1xf32>
    %cst_6 = arith.constant 1.568000e+03 : f32
    %10 = vector.broadcast %cst_6 : f32 to vector<6x1xf32>
    %11 = arith.divf %9, %10 : vector<6x1xf32>
    %12 = arith.mulf %6, %6 : vector<6x1xf32>
    %13 = arith.subf %11, %12 : vector<6x1xf32>
    %c0_7 = arith.constant 0 : index
    %c0_8 = arith.constant 0 : index
    %14 = vector.load %arg2[%c0_7, %c0_8] : memref<6x1xf32, #tpu.memory_space<vmem>>, vector<6x1xf32>
    %cst_9 = arith.constant 9.99999974E-6 : f32
    %15 = vector.broadcast %cst_9 : f32 to vector<6x1xf32>
    %16 = arith.addf %13, %15 : vector<6x1xf32>
    %17 = math.rsqrt %16 : vector<6x1xf32>
    %18 = arith.mulf %14, %17 : vector<6x1xf32>
    %c0_10 = arith.constant 0 : index
    %c0_11 = arith.constant 0 : index
    %19 = vector.load %arg3[%c0_10, %c0_11] : memref<6x1xf32, #tpu.memory_space<vmem>>, vector<6x1xf32>
    %20 = arith.mulf %6, %18 : vector<6x1xf32>
    %21 = arith.subf %19, %20 : vector<6x1xf32>
    %22 = vector.extract_strided_slice %2 {offsets = [0, 0], sizes = [6, 512], strides = [1, 1]} : vector<6x2048xf32> to vector<6x512xf32>
    %23 = vector.broadcast %18 : vector<6x1xf32> to vector<6x512xf32>
    %24 = arith.mulf %22, %23 : vector<6x512xf32>
    %25 = vector.broadcast %21 : vector<6x1xf32> to vector<6x512xf32>
    %26 = arith.addf %24, %25 : vector<6x512xf32>
    %cst_12 = arith.constant 0.000000e+00 : f32
    %27 = vector.broadcast %cst_12 : f32 to vector<6x512xf32>
    %28 = arith.maximumf %26, %27 : vector<6x512xf32>
    %29 = vector.extract_strided_slice %2 {offsets = [0, 512], sizes = [6, 512], strides = [1, 1]} : vector<6x2048xf32> to vector<6x512xf32>
    %30 = vector.broadcast %18 : vector<6x1xf32> to vector<6x512xf32>
    %31 = arith.mulf %29, %30 : vector<6x512xf32>
    %32 = vector.broadcast %21 : vector<6x1xf32> to vector<6x512xf32>
    %33 = arith.addf %31, %32 : vector<6x512xf32>
    %cst_13 = arith.constant 0.000000e+00 : f32
    %34 = vector.broadcast %cst_13 : f32 to vector<6x512xf32>
    %35 = arith.maximumf %33, %34 : vector<6x512xf32>
    %36 = arith.maximumf %28, %35 : vector<6x512xf32>
    %37 = vector.extract_strided_slice %2 {offsets = [0, 1024], sizes = [6, 512], strides = [1, 1]} : vector<6x2048xf32> to vector<6x512xf32>
    %38 = vector.broadcast %18 : vector<6x1xf32> to vector<6x512xf32>
    %39 = arith.mulf %37, %38 : vector<6x512xf32>
    %40 = vector.broadcast %21 : vector<6x1xf32> to vector<6x512xf32>
    %41 = arith.addf %39, %40 : vector<6x512xf32>
    %cst_14 = arith.constant 0.000000e+00 : f32
    %42 = vector.broadcast %cst_14 : f32 to vector<6x512xf32>
    %43 = arith.maximumf %41, %42 : vector<6x512xf32>
    %44 = arith.maximumf %36, %43 : vector<6x512xf32>
    %45 = vector.extract_strided_slice %2 {offsets = [0, 1536], sizes = [6, 512], strides = [1, 1]} : vector<6x2048xf32> to vector<6x512xf32>
    %46 = vector.broadcast %18 : vector<6x1xf32> to vector<6x512xf32>
    %47 = arith.mulf %45, %46 : vector<6x512xf32>
    %48 = vector.broadcast %21 : vector<6x1xf32> to vector<6x512xf32>
    %49 = arith.addf %47, %48 : vector<6x512xf32>
    %cst_15 = arith.constant 0.000000e+00 : f32
    %50 = vector.broadcast %cst_15 : f32 to vector<6x512xf32>
    %51 = arith.maximumf %49, %50 : vector<6x512xf32>
    %52 = arith.maximumf %44, %51 : vector<6x512xf32>
    %c0_16 = arith.constant 0 : index
    %c0_17 = arith.constant 0 : index
    %53 = vector.load %arg4[%c0_16, %c0_17] : memref<6x512xf32, #tpu.memory_space<vmem>>, vector<6x512xf32>
    tpu.vector_store %arg4[%c0_16, %c0_17], %52 {strides = array<i32>} : memref<6x512xf32, #tpu.memory_space<vmem>>, vector<6x512xf32>,
    return
  }
}

module attributes {stable_mosaic.version = 11 : i64} {
  func.func @conv_bn_relu_pool_kernel(%arg0: memref<160x512xbf16, #tpu.memory_space<vmem>>, %arg1: memref<16x160xbf16, #tpu.memory_space<vmem>>, %arg2: memref<16x1xf32, #tpu.memory_space<vmem>>, %arg3: memref<16x1xf32, #tpu.memory_space<vmem>>, %arg4: memref<16x128xf32, #tpu.memory_space<vmem>>) attributes {dimension_semantics = [], scalar_prefetch = 0 : i64, scratch_operands = 0 : i64, tpu.core_type = #tpu.core_type<tc>} {
    %c0 = arith.constant 0 : index
    %c0_0 = arith.constant 0 : index
    %0 = vector.load %arg1[%c0, %c0_0] : memref<16x160xbf16, #tpu.memory_space<vmem>>, vector<16x160xbf16>
    %c0_1 = arith.constant 0 : index
    %c0_2 = arith.constant 0 : index
    %1 = vector.load %arg0[%c0_1, %c0_2] : memref<160x512xbf16, #tpu.memory_space<vmem>>, vector<160x512xbf16>
    %cst = arith.constant dense<0.000000e+00> : vector<16x512xf32>
    %2 = tpu.matmul %0, %1, %cst {dimension_numbers = #tpu.dot_dimension_numbers<[1], [0], [0], [1], [0, 0, 1, 1], [], []>} : vector<16x160xbf16>, vector<160x512xbf16>, vector<16x512xf32> -> vector<16x512xf32>
    %cst_3 = arith.constant dense<0.000000e+00> : vector<16xf32>
    %3 = vector.multi_reduction <add>, %2, %cst_3 [1] : vector<16x512xf32> to vector<16xf32>
    %4 = vector.shape_cast %3 : vector<16xf32> to vector<16x1xf32>
    %cst_4 = arith.constant 2.000000e+02 : f32
    %5 = vector.broadcast %cst_4 : f32 to vector<16x1xf32>
    %6 = arith.divf %4, %5 : vector<16x1xf32>
    %7 = arith.mulf %2, %2 : vector<16x512xf32>
    %cst_5 = arith.constant dense<0.000000e+00> : vector<16xf32>
    %8 = vector.multi_reduction <add>, %7, %cst_5 [1] : vector<16x512xf32> to vector<16xf32>
    %9 = vector.shape_cast %8 : vector<16xf32> to vector<16x1xf32>
    %cst_6 = arith.constant 2.000000e+02 : f32
    %10 = vector.broadcast %cst_6 : f32 to vector<16x1xf32>
    %11 = arith.divf %9, %10 : vector<16x1xf32>
    %12 = arith.mulf %6, %6 : vector<16x1xf32>
    %13 = arith.subf %11, %12 : vector<16x1xf32>
    %c0_7 = arith.constant 0 : index
    %c0_8 = arith.constant 0 : index
    %14 = vector.load %arg2[%c0_7, %c0_8] : memref<16x1xf32, #tpu.memory_space<vmem>>, vector<16x1xf32>
    %cst_9 = arith.constant 9.99999974E-6 : f32
    %15 = vector.broadcast %cst_9 : f32 to vector<16x1xf32>
    %16 = arith.addf %13, %15 : vector<16x1xf32>
    %17 = math.rsqrt %16 : vector<16x1xf32>
    %18 = arith.mulf %14, %17 : vector<16x1xf32>
    %c0_10 = arith.constant 0 : index
    %c0_11 = arith.constant 0 : index
    %19 = vector.load %arg3[%c0_10, %c0_11] : memref<16x1xf32, #tpu.memory_space<vmem>>, vector<16x1xf32>
    %20 = arith.mulf %6, %18 : vector<16x1xf32>
    %21 = arith.subf %19, %20 : vector<16x1xf32>
    %22 = vector.extract_strided_slice %2 {offsets = [0, 0], sizes = [16, 128], strides = [1, 1]} : vector<16x512xf32> to vector<16x128xf32>
    %23 = vector.broadcast %18 : vector<16x1xf32> to vector<16x128xf32>
    %24 = arith.mulf %22, %23 : vector<16x128xf32>
    %25 = vector.broadcast %21 : vector<16x1xf32> to vector<16x128xf32>
    %26 = arith.addf %24, %25 : vector<16x128xf32>
    %cst_12 = arith.constant 0.000000e+00 : f32
    %27 = vector.broadcast %cst_12 : f32 to vector<16x128xf32>
    %28 = arith.maximumf %26, %27 : vector<16x128xf32>
    %29 = vector.extract_strided_slice %2 {offsets = [0, 128], sizes = [16, 128], strides = [1, 1]} : vector<16x512xf32> to vector<16x128xf32>
    %30 = vector.broadcast %18 : vector<16x1xf32> to vector<16x128xf32>
    %31 = arith.mulf %29, %30 : vector<16x128xf32>
    %32 = vector.broadcast %21 : vector<16x1xf32> to vector<16x128xf32>
    %33 = arith.addf %31, %32 : vector<16x128xf32>
    %cst_13 = arith.constant 0.000000e+00 : f32
    %34 = vector.broadcast %cst_13 : f32 to vector<16x128xf32>
    %35 = arith.maximumf %33, %34 : vector<16x128xf32>
    %36 = arith.maximumf %28, %35 : vector<16x128xf32>
    %37 = vector.extract_strided_slice %2 {offsets = [0, 256], sizes = [16, 128], strides = [1, 1]} : vector<16x512xf32> to vector<16x128xf32>
    %38 = vector.broadcast %18 : vector<16x1xf32> to vector<16x128xf32>
    %39 = arith.mulf %37, %38 : vector<16x128xf32>
    %40 = vector.broadcast %21 : vector<16x1xf32> to vector<16x128xf32>
    %41 = arith.addf %39, %40 : vector<16x128xf32>
    %cst_14 = arith.constant 0.000000e+00 : f32
    %42 = vector.broadcast %cst_14 : f32 to vector<16x128xf32>
    %43 = arith.maximumf %41, %42 : vector<16x128xf32>
    %44 = arith.maximumf %36, %43 : vector<16x128xf32>
    %45 = vector.extract_strided_slice %2 {offsets = [0, 384], sizes = [16, 128], strides = [1, 1]} : vector<16x512xf32> to vector<16x128xf32>
    %46 = vector.broadcast %18 : vector<16x1xf32> to vector<16x128xf32>
    %47 = arith.mulf %45, %46 : vector<16x128xf32>
    %48 = vector.broadcast %21 : vector<16x1xf32> to vector<16x128xf32>
    %49 = arith.addf %47, %48 : vector<16x128xf32>
    %cst_15 = arith.constant 0.000000e+00 : f32
    %50 = vector.broadcast %cst_15 : f32 to vector<16x128xf32>
    %51 = arith.maximumf %49, %50 : vector<16x128xf32>
    %52 = arith.maximumf %44, %51 : vector<16x128xf32>
    %c0_16 = arith.constant 0 : index
    %c0_17 = arith.constant 0 : index
    %53 = vector.load %arg4[%c0_16, %c0_17] : memref<16x128xf32, #tpu.memory_space<vmem>>, vector<16x128xf32>
    tpu.vector_store %arg4[%c0_16, %c0_17], %52 {strides = array<i32>} : memref<16x128xf32, #tpu.memory_space<vmem>>, vector<16x128xf32>,
    return
  }
}

module attributes {stable_mosaic.version = 11 : i64} {
  func.func @fc_stack_kernel(%arg0: memref<8x512xbf16, #tpu.memory_space<vmem>>, %arg1: memref<512x128xbf16, #tpu.memory_space<vmem>>, %arg2: memref<1x128xf32, #tpu.memory_space<vmem>>, %arg3: memref<128x128xbf16, #tpu.memory_space<vmem>>, %arg4: memref<1x128xf32, #tpu.memory_space<vmem>>, %arg5: memref<128x128xbf16, #tpu.memory_space<vmem>>, %arg6: memref<1x128xf32, #tpu.memory_space<vmem>>, %arg7: memref<8x128xf32, #tpu.memory_space<vmem>>) attributes {dimension_semantics = [], scalar_prefetch = 0 : i64, scratch_operands = 0 : i64, tpu.core_type = #tpu.core_type<tc>} {
    %c0 = arith.constant 0 : index
    %c0_0 = arith.constant 0 : index
    %0 = vector.load %arg0[%c0, %c0_0] : memref<8x512xbf16, #tpu.memory_space<vmem>>, vector<8x512xbf16>
    %c0_1 = arith.constant 0 : index
    %c0_2 = arith.constant 0 : index
    %1 = vector.load %arg1[%c0_1, %c0_2] : memref<512x128xbf16, #tpu.memory_space<vmem>>, vector<512x128xbf16>
    %cst = arith.constant dense<0.000000e+00> : vector<8x128xf32>
    %2 = tpu.matmul %0, %1, %cst {dimension_numbers = #tpu.dot_dimension_numbers<[1], [0], [0], [1], [0, 0, 1, 1], [], []>} : vector<8x512xbf16>, vector<512x128xbf16>, vector<8x128xf32> -> vector<8x128xf32>
    %c0_3 = arith.constant 0 : index
    %c0_4 = arith.constant 0 : index
    %3 = vector.load %arg2[%c0_3, %c0_4] : memref<1x128xf32, #tpu.memory_space<vmem>>, vector<1x128xf32>
    %4 = vector.broadcast %3 : vector<1x128xf32> to vector<8x128xf32>
    %5 = arith.addf %2, %4 : vector<8x128xf32>
    %6 = arith.truncf %5 : vector<8x128xf32> to vector<8x128xbf16>
    %c0_5 = arith.constant 0 : index
    %c0_6 = arith.constant 0 : index
    %7 = vector.load %arg3[%c0_5, %c0_6] : memref<128x128xbf16, #tpu.memory_space<vmem>>, vector<128x128xbf16>
    %cst_7 = arith.constant dense<0.000000e+00> : vector<8x128xf32>
    %8 = tpu.matmul %6, %7, %cst_7 {dimension_numbers = #tpu.dot_dimension_numbers<[1], [0], [0], [1], [0, 0, 1, 1], [], []>} : vector<8x128xbf16>, vector<128x128xbf16>, vector<8x128xf32> -> vector<8x128xf32>
    %c0_8 = arith.constant 0 : index
    %c0_9 = arith.constant 0 : index
    %9 = vector.load %arg4[%c0_8, %c0_9] : memref<1x128xf32, #tpu.memory_space<vmem>>, vector<1x128xf32>
    %10 = vector.broadcast %9 : vector<1x128xf32> to vector<8x128xf32>
    %11 = arith.addf %8, %10 : vector<8x128xf32>
    %12 = arith.truncf %11 : vector<8x128xf32> to vector<8x128xbf16>
    %c0_10 = arith.constant 0 : index
    %c0_11 = arith.constant 0 : index
    %13 = vector.load %arg5[%c0_10, %c0_11] : memref<128x128xbf16, #tpu.memory_space<vmem>>, vector<128x128xbf16>
    %cst_12 = arith.constant dense<0.000000e+00> : vector<8x128xf32>
    %14 = tpu.matmul %12, %13, %cst_12 {dimension_numbers = #tpu.dot_dimension_numbers<[1], [0], [0], [1], [0, 0, 1, 1], [], []>} : vector<8x128xbf16>, vector<128x128xbf16>, vector<8x128xf32> -> vector<8x128xf32>
    %c0_13 = arith.constant 0 : index
    %c0_14 = arith.constant 0 : index
    %15 = vector.load %arg6[%c0_13, %c0_14] : memref<1x128xf32, #tpu.memory_space<vmem>>, vector<1x128xf32>
    %16 = vector.broadcast %15 : vector<1x128xf32> to vector<8x128xf32>
    %17 = arith.addf %14, %16 : vector<8x128xf32>
    %c0_15 = arith.constant 0 : index
    %c0_16 = arith.constant 0 : index
    %18 = vector.load %arg7[%c0_15, %c0_16] : memref<8x128xf32, #tpu.memory_space<vmem>>, vector<8x128xf32>
    tpu.vector_store %arg7[%c0_15, %c0_16], %17 {strides = array<i32>} : memref<8x128xf32, #tpu.memory_space<vmem>>, vector<8x128xf32>,
    return
  }
}

</mosaic_0001>

<llo_original>
// kernel: lenet_forward.3
$region0: #{lenet_forward.3}
  #allocation0 [shape = 'u32[]', space=smem, size = 0x4, offset = 0x4, fixed_abs, tag = 'smem constant byte address 0x4 - core index']
  #allocation1 [shape = 'u32[144,128]{1,0:T(1,128)}', space=vmem, size = 0x12000, scoped, tag = 'internal scratch']
  %s0 = inlined_call_operand.vmem [shape: bf16[80,2048], index: 0, kind: input, shape index: {}]
  %s1 = inlined_call_operand.vmem [shape: bf16[6,80], index: 1, kind: input, shape index: {}]
  %s2 = inlined_call_operand.vmem [shape: f32[6,1], index: 2, kind: input, shape index: {}]
  %s3 = inlined_call_operand.vmem [shape: f32[6,1], index: 3, kind: input, shape index: {}]
  %s4 = inlined_call_operand.vmem [shape: f32[6,512], index: 4, kind: output, shape index: {}]
  %s5 = sld [smem:[#allocation0]]
  $region26: #{lenet_forward.3} parent=0
    _
  %s7 = ssub.s32 1, %s5
  %s8 = scalar_select 0, %s7, %s5
  // Predicated region
  $region2: #{lenet_forward.3} parent=0 // pred_check
    _
  $region3: #{lenet_forward.3} parent=0 // pred_check_branch
    %10 = sbr.rel (0) target = $region5
  $region4: #{lenet_forward.3} parent=0 // pred_region
    _
  $region5: #{lenet_forward.3} parent=0 // pred_fallthru
    _
  // Predicated region
  $region6: #{lenet_forward.3} parent=0 // pred_check
    _
  $region7: #{lenet_forward.3} parent=0 // pred_check_branch
    %12 = sbr.rel (0) target = $region9
  $region8: #{lenet_forward.3} parent=0 // pred_region
    _
  $region9: #{lenet_forward.3} parent=0 // pred_fallthru
    _
  // Predicated region
  $region10: #{lenet_forward.3} parent=0 // pred_check
    _
  $region11: #{lenet_forward.3} parent=0 // pred_check_branch
    %14 = sbr.rel (0) target = $region13
  $region12: #{lenet_forward.3} parent=0 // pred_region
    _
  $region13: #{lenet_forward.3} parent=0 // pred_fallthru
    _
  // Predicated region
  $region14: #{lenet_forward.3} parent=0 // pred_check
    _
  $region15: #{lenet_forward.3} parent=0 // pred_check_branch
    %16 = sbr.rel (0) target = $region17
  $region16: #{lenet_forward.3} parent=0 // pred_region
    _
  $region17: #{lenet_forward.3} parent=0 // pred_fallthru
    _
  %v18 = vld [vmem:[%s1] sm:$0x7]
  %v19 = vld [vmem:[%s0] sm:$0xff]
  %v20 = vld [vmem:[%s0 + $0x8] sm:$0xff]
  %v21 = vld [vmem:[%s0 + $0x10] sm:$0xff]
  %v22 = vld [vmem:[%s0 + $0x18] sm:$0xff]
  %v23 = vld [vmem:[%s0 + $0x20] sm:$0xff]
  %v24 = vld [vmem:[%s0 + $0x28] sm:$0xff]
  %v25 = vld [vmem:[%s0 + $0x30] sm:$0xff]
  %v26 = vld [vmem:[%s0 + $0x38] sm:$0xff]
  %v27 = vld [vmem:[%s0 + $0x40] sm:$0xff]
  %v28 = vld [vmem:[%s0 + $0x48] sm:$0xff]
  %v29 = vld [vmem:[%s0 + $0x50] sm:$0xff]
  %v30 = vld [vmem:[%s0 + $0x58] sm:$0xff]
  %v31 = vld [vmem:[%s0 + $0x60] sm:$0xff]
  %v32 = vld [vmem:[%s0 + $0x68] sm:$0xff]
  %v33 = vld [vmem:[%s0 + $0x70] sm:$0xff]
  %v34 = vld [vmem:[%s0 + $0x78] sm:$0xff]
  %v35 = vld [vmem:[%s0 + $0x80] sm:$0xff]
  %v36 = vld [vmem:[%s0 + $0x88] sm:$0xff]
  %v37 = vld [vmem:[%s0 + $0x90] sm:$0xff]
  %v38 = vld [vmem:[%s0 + $0x98] sm:$0xff]
  %v39 = vld [vmem:[%s0 + $0xa0] sm:$0xff]
  %v40 = vld [vmem:[%s0 + $0xa8] sm:$0xff]
  %v41 = vld [vmem:[%s0 + $0xb0] sm:$0xff]
  %v42 = vld [vmem:[%s0 + $0xb8] sm:$0xff]
  %v43 = vld [vmem:[%s0 + $0xc0] sm:$0xff]
  %v44 = vld [vmem:[%s0 + $0xc8] sm:$0xff]
  %v45 = vld [vmem:[%s0 + $0xd0] sm:$0xff]
  %v46 = vld [vmem:[%s0 + $0xd8] sm:$0xff]
  %v47 = vld [vmem:[%s0 + $0xe0] sm:$0xff]
  %v48 = vld [vmem:[%s0 + $0xe8] sm:$0xff]
  %v49 = vld [vmem:[%s0 + $0xf0] sm:$0xff]
  %v50 = vld [vmem:[%s0 + $0xf8] sm:$0xff]
  %v51 = vld [vmem:[%s0 + $0x100] sm:$0xff]
  %v52 = vld [vmem:[%s0 + $0x108] sm:$0xff]
  %v53 = vld [vmem:[%s0 + $0x110] sm:$0xff]
  %v54 = vld [vmem:[%s0 + $0x118] sm:$0xff]
  %v55 = vld [vmem:[%s0 + $0x120] sm:$0xff]
  %v56 = vld [vmem:[%s0 + $0x128] sm:$0xff]
  %v57 = vld [vmem:[%s0 + $0x130] sm:$0xff]
  %v58 = vld [vmem:[%s0 + $0x138] sm:$0xff]
  %v59 = vld [vmem:[%s0 + $0x140] sm:$0xff]
  %v60 = vld [vmem:[%s0 + $0x148] sm:$0xff]
  %v61 = vld [vmem:[%s0 + $0x150] sm:$0xff]
  %v62 = vld [vmem:[%s0 + $0x158] sm:$0xff]
  %v63 = vld [vmem:[%s0 + $0x160] sm:$0xff]
  %v64 = vld [vmem:[%s0 + $0x168] sm:$0xff]
  %v65 = vld [vmem:[%s0 + $0x170] sm:$0xff]
  %v66 = vld [vmem:[%s0 + $0x178] sm:$0xff]
  %v67 = vld [vmem:[%s0 + $0x180] sm:$0xff]
  %v68 = vld [vmem:[%s0 + $0x188] sm:$0xff]
  %v69 = vld [vmem:[%s0 + $0x190] sm:$0xff]
  %v70 = vld [vmem:[%s0 + $0x198] sm:$0xff]
  %v71 = vld [vmem:[%s0 + $0x1a0] sm:$0xff]
  %v72 = vld [vmem:[%s0 + $0x1a8] sm:$0xff]
  %v73 = vld [vmem:[%s0 + $0x1b0] sm:$0xff]
  %v74 = vld [vmem:[%s0 + $0x1b8] sm:$0xff]
  %v75 = vld [vmem:[%s0 + $0x1c0] sm:$0xff]
  %v76 = vld [vmem:[%s0 + $0x1c8] sm:$0xff]
  %v77 = vld [vmem:[%s0 + $0x1d0] sm:$0xff]
  %v78 = vld [vmem:[%s0 + $0x1d8] sm:$0xff]
  %v79 = vld [vmem:[%s0 + $0x1e0] sm:$0xff]
  %v80 = vld [vmem:[%s0 + $0x1e8] sm:$0xff]
  %v81 = vld [vmem:[%s0 + $0x1f0] sm:$0xff]
  %v82 = vld [vmem:[%s0 + $0x1f8] sm:$0xff]
  %v83 = vld [vmem:[%s0 + $0x200] sm:$0xff]
  %v84 = vld [vmem:[%s0 + $0x208] sm:$0xff]
  %v85 = vld [vmem:[%s0 + $0x210] sm:$0xff]
  %v86 = vld [vmem:[%s0 + $0x218] sm:$0xff]
  %v87 = vld [vmem:[%s0 + $0x220] sm:$0xff]
  %v88 = vld [vmem:[%s0 + $0x228] sm:$0xff]
  %v89 = vld [vmem:[%s0 + $0x230] sm:$0xff]
  %v90 = vld [vmem:[%s0 + $0x238] sm:$0xff]
  %v91 = vld [vmem:[%s0 + $0x240] sm:$0xff]
  %v92 = vld [vmem:[%s0 + $0x248] sm:$0xff]
  %v93 = vld [vmem:[%s0 + $0x250] sm:$0xff]
  %v94 = vld [vmem:[%s0 + $0x258] sm:$0xff]
  %v95 = vld [vmem:[%s0 + $0x260] sm:$0xff]
  %v96 = vld [vmem:[%s0 + $0x268] sm:$0xff]
  %v97 = vld [vmem:[%s0 + $0x270] sm:$0xff]
  %v98 = vld [vmem:[%s0 + $0x278] sm:$0xff]
  %v179 = vunpack.c.l.b16 %v19
  %v180 = vunpack.c.h.b16 %v19
  %v181 = vunpack.c.l.b16 %v20
  %v182 = vunpack.c.h.b16 %v20
  %v183 = vunpack.c.l.b16 %v21
  %v184 = vunpack.c.h.b16 %v21
  %v185 = vunpack.c.l.b16 %v22
  %v186 = vunpack.c.h.b16 %v22
  %v187 = vunpack.c.l.b16 %v23
  %v188 = vunpack.c.h.b16 %v23
  %v189 = vunpack.c.l.b16 %v24
  %v190 = vunpack.c.h.b16 %v24
  %v191 = vunpack.c.l.b16 %v25
  %v192 = vunpack.c.h.b16 %v25
  %v193 = vunpack.c.l.b16 %v26
  %v194 = vunpack.c.h.b16 %v26
  %v195 = vunpack.c.l.b16 %v27
  %v196 = vunpack.c.h.b16 %v27
  %v197 = vunpack.c.l.b16 %v28
  %v198 = vunpack.c.h.b16 %v28
  %v199 = vunpack.c.l.b16 %v29
  %v200 = vunpack.c.h.b16 %v29
  %v201 = vunpack.c.l.b16 %v30
  %v202 = vunpack.c.h.b16 %v30
  %v203 = vunpack.c.l.b16 %v31
  %v204 = vunpack.c.h.b16 %v31
  %v205 = vunpack.c.l.b16 %v32
  %v206 = vunpack.c.h.b16 %v32
  %v207 = vunpack.c.l.b16 %v33
  %v208 = vunpack.c.h.b16 %v33
  %v209 = vunpack.c.l.b16 %v34
  %v210 = vunpack.c.h.b16 %v34
  %v211 = vunpack.c.l.b16 %v35
  %v212 = vunpack.c.h.b16 %v35
  %v213 = vunpack.c.l.b16 %v36
  %v214 = vunpack.c.h.b16 %v36
  %v215 = vunpack.c.l.b16 %v37
  %v216 = vunpack.c.h.b16 %v37
  %v217 = vunpack.c.l.b16 %v38
  %v218 = vunpack.c.h.b16 %v38
  %v219 = vunpack.c.l.b16 %v39
  %v220 = vunpack.c.h.b16 %v39
  %v221 = vunpack.c.l.b16 %v40
  %v222 = vunpack.c.h.b16 %v40
  %v223 = vunpack.c.l.b16 %v41
  %v224 = vunpack.c.h.b16 %v41
  %v225 = vunpack.c.l.b16 %v42
  %v226 = vunpack.c.h.b16 %v42
  %v227 = vunpack.c.l.b16 %v43
  %v228 = vunpack.c.h.b16 %v43
  %v229 = vunpack.c.l.b16 %v44
  %v230 = vunpack.c.h.b16 %v44
  %v231 = vunpack.c.l.b16 %v45
  %v232 = vunpack.c.h.b16 %v45
  %v233 = vunpack.c.l.b16 %v46
  %v234 = vunpack.c.h.b16 %v46
  %v235 = vunpack.c.l.b16 %v47
  %v236 = vunpack.c.h.b16 %v47
  %v237 = vunpack.c.l.b16 %v48
  %v238 = vunpack.c.h.b16 %v48
  %v239 = vunpack.c.l.b16 %v49
  %v240 = vunpack.c.h.b16 %v49
  %v241 = vunpack.c.l.b16 %v50
  %v242 = vunpack.c.h.b16 %v50
  %v243 = vunpack.c.l.b16 %v51
  %v244 = vunpack.c.h.b16 %v51
  %v245 = vunpack.c.l.b16 %v52
  %v246 = vunpack.c.h.b16 %v52
  %v247 = vunpack.c.l.b16 %v53
  %v248 = vunpack.c.h.b16 %v53
  %v249 = vunpack.c.l.b16 %v54
  %v250 = vunpack.c.h.b16 %v54
  %v251 = vunpack.c.l.b16 %v55
  %v252 = vunpack.c.h.b16 %v55
  %v253 = vunpack.c.l.b16 %v56
  %v254 = vunpack.c.h.b16 %v56
  %v255 = vunpack.c.l.b16 %v57
  %v256 = vunpack.c.h.b16 %v57
  %v257 = vunpack.c.l.b16 %v58
  %v258 = vunpack.c.h.b16 %v58
  %v259 = vunpack.c.l.b16 %v59
  %v260 = vunpack.c.h.b16 %v59
  %v261 = vunpack.c.l.b16 %v60
  %v262 = vunpack.c.h.b16 %v60
  %v263 = vunpack.c.l.b16 %v61
  %v264 = vunpack.c.h.b16 %v61
  %v265 = vunpack.c.l.b16 %v62
  %v266 = vunpack.c.h.b16 %v62
  %v267 = vunpack.c.l.b16 %v63
  %v268 = vunpack.c.h.b16 %v63
  %v269 = vunpack.c.l.b16 %v64
  %v270 = vunpack.c.h.b16 %v64
  %v271 = vunpack.c.l.b16 %v65
  %v272 = vunpack.c.h.b16 %v65
  %v273 = vunpack.c.l.b16 %v66
  %v274 = vunpack.c.h.b16 %v66
  %v275 = vunpack.c.l.b16 %v67
  %v276 = vunpack.c.h.b16 %v67
  %v277 = vunpack.c.l.b16 %v68
  %v278 = vunpack.c.h.b16 %v68
  %v279 = vunpack.c.l.b16 %v69
  %v280 = vunpack.c.h.b16 %v69
  %v281 = vunpack.c.l.b16 %v70
  %v282 = vunpack.c.h.b16 %v70
  %v283 = vunpack.c.l.b16 %v71
  %v284 = vunpack.c.h.b16 %v71
  %v285 = vunpack.c.l.b16 %v72
  %v286 = vunpack.c.h.b16 %v72
  %v287 = vunpack.c.l.b16 %v73
  %v288 = vunpack.c.h.b16 %v73
  %v289 = vunpack.c.l.b16 %v74
  %v290 = vunpack.c.h.b16 %v74
  %v291 = vunpack.c.l.b16 %v75
  %v292 = vunpack.c.h.b16 %v75
  %v293 = vunpack.c.l.b16 %v76
  %v294 = vunpack.c.h.b16 %v76
  %v295 = vunpack.c.l.b16 %v77
  %v296 = vunpack.c.h.b16 %v77
  %v297 = vunpack.c.l.b16 %v78
  %v298 = vunpack.c.h.b16 %v78
  %v299 = vunpack.c.l.b16 %v79
  %v300 = vunpack.c.h.b16 %v79
  %v301 = vunpack.c.l.b16 %v80
  %v302 = vunpack.c.h.b16 %v80
  %v303 = vunpack.c.l.b16 %v81
  %v304 = vunpack.c.h.b16 %v81
  %v305 = vunpack.c.l.b16 %v82
  %v306 = vunpack.c.h.b16 %v82
  %v307 = vunpack.c.l.b16 %v83
  %v308 = vunpack.c.h.b16 %v83
  %v309 = vunpack.c.l.b16 %v84
  %v310 = vunpack.c.h.b16 %v84
  %v311 = vunpack.c.l.b16 %v85
  %v312 = vunpack.c.h.b16 %v85
  %v313 = vunpack.c.l.b16 %v86
  %v314 = vunpack.c.h.b16 %v86
  %v315 = vunpack.c.l.b16 %v87
  %v316 = vunpack.c.h.b16 %v87
  %v317 = vunpack.c.l.b16 %v88
  %v318 = vunpack.c.h.b16 %v88
  %v319 = vunpack.c.l.b16 %v89
  %v320 = vunpack.c.h.b16 %v89
  %v321 = vunpack.c.l.b16 %v90
  %v322 = vunpack.c.h.b16 %v90
  %v323 = vunpack.c.l.b16 %v91
  %v324 = vunpack.c.h.b16 %v91
  %v325 = vunpack.c.l.b16 %v92
  %v326 = vunpack.c.h.b16 %v92
  %v327 = vunpack.c.l.b16 %v93
  %v328 = vunpack.c.h.b16 %v93
  %v329 = vunpack.c.l.b16 %v94
  %v330 = vunpack.c.h.b16 %v94
  %v331 = vunpack.c.l.b16 %v95
  %v332 = vunpack.c.h.b16 %v95
  %v333 = vunpack.c.l.b16 %v96
  %v334 = vunpack.c.h.b16 %v96
  %v335 = vunpack.c.l.b16 %v97
  %v336 = vunpack.c.h.b16 %v97
  %v337 = vunpack.c.l.b16 %v98
  %v338 = vunpack.c.h.b16 %v98
  %v339 = vpack.c.b16 %v195, %v179
  %v340 = vpack.c.b16 %v196, %v180
  %v341 = vpack.c.b16 %v197, %v181
  %v342 = vpack.c.b16 %v198, %v182
  %v343 = vpack.c.b16 %v199, %v183
  %v344 = vpack.c.b16 %v200, %v184
  %v345 = vpack.c.b16 %v201, %v185
  %v346 = vpack.c.b16 %v202, %v186
  %v347 = vpack.c.b16 %v203, %v187
  %v348 = vpack.c.b16 %v204, %v188
  %v349 = vpack.c.b16 %v205, %v189
  %v350 = vpack.c.b16 %v206, %v190
  %v351 = vpack.c.b16 %v207, %v191
  %v352 = vpack.c.b16 %v208, %v192
  %v353 = vpack.c.b16 %v209, %v193
  %v354 = vpack.c.b16 %v210, %v194
  %v355 = vpack.c.b16 %v227, %v211
  %v356 = vpack.c.b16 %v228, %v212
  %v357 = vpack.c.b16 %v229, %v213
  %v358 = vpack.c.b16 %v230, %v214
  %v359 = vpack.c.b16 %v231, %v215
  %v360 = vpack.c.b16 %v232, %v216
  %v361 = vpack.c.b16 %v233, %v217
  %v362 = vpack.c.b16 %v234, %v218
  %v363 = vpack.c.b16 %v235, %v219
  %v364 = vpack.c.b16 %v236, %v220
  %v365 = vpack.c.b16 %v237, %v221
  %v366 = vpack.c.b16 %v238, %v222
  %v367 = vpack.c.b16 %v239, %v223
  %v368 = vpack.c.b16 %v240, %v224
  %v369 = vpack.c.b16 %v241, %v225
  %v370 = vpack.c.b16 %v242, %v226
  %v371 = vpack.c.b16 %v259, %v243
  %v372 = vpack.c.b16 %v260, %v244
  %v373 = vpack.c.b16 %v261, %v245
  %v374 = vpack.c.b16 %v262, %v246
  %v375 = vpack.c.b16 %v263, %v247
  %v376 = vpack.c.b16 %v264, %v248
  %v377 = vpack.c.b16 %v265, %v249
  %v378 = vpack.c.b16 %v266, %v250
  %v379 = vpack.c.b16 %v267, %v251
  %v380 = vpack.c.b16 %v268, %v252
  %v381 = vpack.c.b16 %v269, %v253
  %v382 = vpack.c.b16 %v270, %v254
  %v383 = vpack.c.b16 %v271, %v255
  %v384 = vpack.c.b16 %v272, %v256
  %v385 = vpack.c.b16 %v273, %v257
  %v386 = vpack.c.b16 %v274, %v258
  %v387 = vpack.c.b16 %v291, %v275
  %v388 = vpack.c.b16 %v292, %v276
  %v389 = vpack.c.b16 %v293, %v277
  %v390 = vpack.c.b16 %v294, %v278
  %v391 = vpack.c.b16 %v295, %v279
  %v392 = vpack.c.b16 %v296, %v280
  %v393 = vpack.c.b16 %v297, %v281
  %v394 = vpack.c.b16 %v298, %v282
  %v395 = vpack.c.b16 %v299, %v283
  %v396 = vpack.c.b16 %v300, %v284
  %v397 = vpack.c.b16 %v301, %v285
  %v398 = vpack.c.b16 %v302, %v286
  %v399 = vpack.c.b16 %v303, %v287
  %v400 = vpack.c.b16 %v304, %v288
  %v401 = vpack.c.b16 %v305, %v289
  %v402 = vpack.c.b16 %v306, %v290
  %v403 = vpack.c.b16 %v323, %v307
  %v404 = vpack.c.b16 %v324, %v308
  %v405 = vpack.c.b16 %v325, %v309
  %v406 = vpack.c.b16 %v326, %v310
  %v407 = vpack.c.b16 %v327, %v311
  %v408 = vpack.c.b16 %v328, %v312
  %v409 = vpack.c.b16 %v329, %v313
  %v410 = vpack.c.b16 %v330, %v314
  %v411 = vpack.c.b16 %v331, %v315
  %v412 = vpack.c.b16 %v332, %v316
  %v413 = vpack.c.b16 %v333, %v317
  %v414 = vpack.c.b16 %v334, %v318
  %v415 = vpack.c.b16 %v335, %v319
  %v416 = vpack.c.b16 %v336, %v320
  %v417 = vpack.c.b16 %v337, %v321
  %v418 = vpack.c.b16 %v338, %v322
  %vm499 = vcmask 654336
  %v501 = vsel %vm499, %v18, 0
  %503 = vmatprep.subr.bf16.mxu0 0
  %504 = vmatpush1.bf16.msra.mxu0 0
  %505 = vmatprep.subr.bf16.mxu0 0
  %506 = vmatpush1.bf16.msra.mxu0 0
  %507 = vmatprep.subr.bf16.mxu0 0
  %508 = vmatpush1.bf16.msra.mxu0 0
  %509 = vmatprep.subr.bf16.mxu0 %v404
  %510 = vmatpush1.bf16.msra.mxu0 %v403
  %511 = vmatprep.subr.bf16.mxu0 %v388
  %512 = vmatpush1.bf16.msra.mxu0 %v387
  %513 = vmatprep.subr.bf16.mxu0 %v372
  %514 = vmatpush1.bf16.msra.mxu0 %v371
  %515 = vmatprep.subr.bf16.mxu0 %v356
  %516 = vmatpush1.bf16.msra.mxu0 %v355
  %517 = vmatprep.subr.bf16.mxu0 %v340
  %518 = vmatpush1.bf16.msra.mxu0 %v339
  %519 = vmatprep.subr.bf16.mxu0 0
  %520 = vmatpush2.bf16.msra.mxu0 0
  %521 = vmatprep.subr.bf16.mxu0 0
  %522 = vmatpush2.bf16.msra.mxu0 0
  %523 = vmatprep.subr.bf16.mxu0 0
  %524 = vmatpush2.bf16.msra.mxu0 0
  %525 = vmatprep.subr.bf16.mxu0 0
  %526 = vmatpush2.bf16.msra.mxu0 0
  %527 = vmatprep.subr.bf16.mxu0 0
  %528 = vmatpush2.bf16.msra.mxu0 0
  %529 = vmatprep.subr.bf16.mxu0 0
  %530 = vmatpush2.bf16.msra.mxu0 0
  %531 = vmatprep.subr.bf16.mxu0 0
  %532 = vmatpush2.bf16.msra.mxu0 0
  %533 = vmatprep.subr.bf16.mxu0 0
  %534 = vmatpush2.bf16.msra.mxu0 0
  %535 = vmatprep.mubr.bf16.mxu0 0
  %536 = vmatmul.mubr.bf16.gmra.mxu0 %v501
  %v537 = vpop.f32.mrf.mxu0
  %v538 = vadd.f32 0.0, %v537
  %v539 = vpop.f32.mrf.mxu0
  %v540 = vadd.f32 0.0, %v539
  %v541 = vpop.f32.mrf.mxu0
  %v542 = vpop.f32.mrf.mxu0
  %543 = vdwg.mxu0
  %544 = vmatprep.subr.bf16.mxu0 0
  %545 = vmatpush1.bf16.msra.mxu0 0
  %546 = vmatprep.subr.bf16.mxu0 0
  %547 = vmatpush1.bf16.msra.mxu0 0
  %548 = vmatprep.subr.bf16.mxu0 0
  %549 = vmatpush1.bf16.msra.mxu0 0
  %550 = vmatprep.subr.bf16.mxu0 %v406
  %551 = vmatpush1.bf16.msra.mxu0 %v405
  %552 = vmatprep.subr.bf16.mxu0 %v390
  %553 = vmatpush1.bf16.msra.mxu0 %v389
  %554 = vmatprep.subr.bf16.mxu0 %v374
  %555 = vmatpush1.bf16.msra.mxu0 %v373
  %556 = vmatprep.subr.bf16.mxu0 %v358
  %557 = vmatpush1.bf16.msra.mxu0 %v357
  %558 = vmatprep.subr.bf16.mxu0 %v342
  %559 = vmatpush1.bf16.msra.mxu0 %v341
  %560 = vmatprep.subr.bf16.mxu0 0
  %561 = vmatpush2.bf16.msra.mxu0 0
  %562 = vmatprep.subr.bf16.mxu0 0
  %563 = vmatpush2.bf16.msra.mxu0 0
  %564 = vmatprep.subr.bf16.mxu0 0
  %565 = vmatpush2.bf16.msra.mxu0 0
  %566 = vmatprep.subr.bf16.mxu0 0
  %567 = vmatpush2.bf16.msra.mxu0 0
  %568 = vmatprep.subr.bf16.mxu0 0
  %569 = vmatpush2.bf16.msra.mxu0 0
  %570 = vmatprep.subr.bf16.mxu0 0
  %571 = vmatpush2.bf16.msra.mxu0 0
  %572 = vmatprep.subr.bf16.mxu0 0
  %573 = vmatpush2.bf16.msra.mxu0 0
  %574 = vmatprep.subr.bf16.mxu0 0
  %575 = vmatpush2.bf16.msra.mxu0 0
  %576 = vmatprep.mubr.bf16.mxu0 0
  %577 = vmatmul.mubr.bf16.gmra.mxu0 %v501
  %v578 = vpop.f32.mrf.mxu0
  %v579 = vadd.f32 0.0, %v578
  %v580 = vpop.f32.mrf.mxu0
  %v581 = vadd.f32 0.0, %v580
  %v582 = vpop.f32.mrf.mxu0
  %v583 = vpop.f32.mrf.mxu0
  %584 = vdwg.mxu0
  %585 = vmatprep.subr.bf16.mxu0 0
  %586 = vmatpush1.bf16.msra.mxu0 0
  %587 = vmatprep.subr.bf16.mxu0 0
  %588 = vmatpush1.bf16.msra.mxu0 0
  %589 = vmatprep.subr.bf16.mxu0 0
  %590 = vmatpush1.bf16.msra.mxu0 0
  %591 = vmatprep.subr.bf16.mxu0 %v408
  %592 = vmatpush1.bf16.msra.mxu0 %v407
  %593 = vmatprep.subr.bf16.mxu0 %v392
  %594 = vmatpush1.bf16.msra.mxu0 %v391
  %595 = vmatprep.subr.bf16.mxu0 %v376
  %596 = vmatpush1.bf16.msra.mxu0 %v375
  %597 = vmatprep.subr.bf16.mxu0 %v360
  %598 = vmatpush1.bf16.msra.mxu0 %v359
  %599 = vmatprep.subr.bf16.mxu0 %v344
  %600 = vmatpush1.bf16.msra.mxu0 %v343
  %601 = vmatprep.subr.bf16.mxu0 0
  %602 = vmatpush2.bf16.msra.mxu0 0
  %603 = vmatprep.subr.bf16.mxu0 0
  %604 = vmatpush2.bf16.msra.mxu0 0
  %605 = vmatprep.subr.bf16.mxu0 0
  %606 = vmatpush2.bf16.msra.mxu0 0
  %607 = vmatprep.subr.bf16.mxu0 0
  %608 = vmatpush2.bf16.msra.mxu0 0
  %609 = vmatprep.subr.bf16.mxu0 0
  %610 = vmatpush2.bf16.msra.mxu0 0
  %611 = vmatprep.subr.bf16.mxu0 0
  %612 = vmatpush2.bf16.msra.mxu0 0
  %613 = vmatprep.subr.bf16.mxu0 0
  %614 = vmatpush2.bf16.msra.mxu0 0
  %615 = vmatprep.subr.bf16.mxu0 0
  %616 = vmatpush2.bf16.msra.mxu0 0
  %617 = vmatprep.mubr.bf16.mxu0 0
  %618 = vmatmul.mubr.bf16.gmra.mxu0 %v501
  %v619 = vpop.f32.mrf.mxu0
  %v620 = vadd.f32 0.0, %v619
  %v621 = vpop.f32.mrf.mxu0
  %v622 = vadd.f32 0.0, %v621
  %v623 = vpop.f32.mrf.mxu0
  %v624 = vpop.f32.mrf.mxu0
  %625 = vdwg.mxu0
  %626 = vmatprep.subr.bf16.mxu0 0
  %627 = vmatpush1.bf16.msra.mxu0 0
  %628 = vmatprep.subr.bf16.mxu0 0
  %629 = vmatpush1.bf16.msra.mxu0 0
  %630 = vmatprep.subr.bf16.mxu0 0
  %631 = vmatpush1.bf16.msra.mxu0 0
  %632 = vmatprep.subr.bf16.mxu0 %v410
  %633 = vmatpush1.bf16.msra.mxu0 %v409
  %634 = vmatprep.subr.bf16.mxu0 %v394
  %635 = vmatpush1.bf16.msra.mxu0 %v393
  %636 = vmatprep.subr.bf16.mxu0 %v378
  %637 = vmatpush1.bf16.msra.mxu0 %v377
  %638 = vmatprep.subr.bf16.mxu0 %v362
  %639 = vmatpush1.bf16.msra.mxu0 %v361
  %640 = vmatprep.subr.bf16.mxu0 %v346
  %641 = vmatpush1.bf16.msra.mxu0 %v345
  %642 = vmatprep.subr.bf16.mxu0 0
  %643 = vmatpush2.bf16.msra.mxu0 0
  %644 = vmatprep.subr.bf16.mxu0 0
  %645 = vmatpush2.bf16.msra.mxu0 0
  %646 = vmatprep.subr.bf16.mxu0 0
  %647 = vmatpush2.bf16.msra.mxu0 0
  %648 = vmatprep.subr.bf16.mxu0 0
  %649 = vmatpush2.bf16.msra.mxu0 0
  %650 = vmatprep.subr.bf16.mxu0 0
  %651 = vmatpush2.bf16.msra.mxu0 0
  %652 = vmatprep.subr.bf16.mxu0 0
  %653 = vmatpush2.bf16.msra.mxu0 0
  %654 = vmatprep.subr.bf16.mxu0 0
  %655 = vmatpush2.bf16.msra.mxu0 0
  %656 = vmatprep.subr.bf16.mxu0 0
  %657 = vmatpush2.bf16.msra.mxu0 0
  %658 = vmatprep.mubr.bf16.mxu0 0
  %659 = vmatmul.mubr.bf16.gmra.mxu0 %v501
  %v660 = vpop.f32.mrf.mxu0
  %v661 = vadd.f32 0.0, %v660
  %v662 = vpop.f32.mrf.mxu0
  %v663 = vadd.f32 0.0, %v662
  %v664 = vpop.f32.mrf.mxu0
  %v665 = vpop.f32.mrf.mxu0
  %666 = vdwg.mxu0
  %667 = vmatprep.subr.bf16.mxu0 0
  %668 = vmatpush1.bf16.msra.mxu0 0
  %669 = vmatprep.subr.bf16.mxu0 0
  %670 = vmatpush1.bf16.msra.mxu0 0
  %671 = vmatprep.subr.bf16.mxu0 0
  %672 = vmatpush1.bf16.msra.mxu0 0
  %673 = vmatprep.subr.bf16.mxu0 %v412
  %674 = vmatpush1.bf16.msra.mxu0 %v411
  %675 = vmatprep.subr.bf16.mxu0 %v396
  %676 = vmatpush1.bf16.msra.mxu0 %v395
  %677 = vmatprep.subr.bf16.mxu0 %v380
  %678 = vmatpush1.bf16.msra.mxu0 %v379
  %679 = vmatprep.subr.bf16.mxu0 %v364
  %680 = vmatpush1.bf16.msra.mxu0 %v363
  %681 = vmatprep.subr.bf16.mxu0 %v348
  %682 = vmatpush1.bf16.msra.mxu0 %v347
  %683 = vmatprep.subr.bf16.mxu0 0
  %684 = vmatpush2.bf16.msra.mxu0 0
  %685 = vmatprep.subr.bf16.mxu0 0
  %686 = vmatpush2.bf16.msra.mxu0 0
  %687 = vmatprep.subr.bf16.mxu0 0
  %688 = vmatpush2.bf16.msra.mxu0 0
  %689 = vmatprep.subr.bf16.mxu0 0
  %690 = vmatpush2.bf16.msra.mxu0 0
  %691 = vmatprep.subr.bf16.mxu0 0
  %692 = vmatpush2.bf16.msra.mxu0 0
  %693 = vmatprep.subr.bf16.mxu0 0
  %694 = vmatpush2.bf16.msra.mxu0 0
  %695 = vmatprep.subr.bf16.mxu0 0
  %696 = vmatpush2.bf16.msra.mxu0 0
  %697 = vmatprep.subr.bf16.mxu0 0
  %698 = vmatpush2.bf16.msra.mxu0 0
  %699 = vmatprep.mubr.bf16.mxu0 0
  %700 = vmatmul.mubr.bf16.gmra.mxu0 %v501
  %v701 = vpop.f32.mrf.mxu0
  %v702 = vadd.f32 0.0, %v701
  %v703 = vpop.f32.mrf.mxu0
  %v704 = vadd.f32 0.0, %v703
  %v705 = vpop.f32.mrf.mxu0
  %v706 = vpop.f32.mrf.mxu0
  %707 = vdwg.mxu0
  %708 = vmatprep.subr.bf16.mxu0 0
  %709 = vmatpush1.bf16.msra.mxu0 0
  %710 = vmatprep.subr.bf16.mxu0 0
  %711 = vmatpush1.bf16.msra.mxu0 0
  %712 = vmatprep.subr.bf16.mxu0 0
  %713 = vmatpush1.bf16.msra.mxu0 0
  %714 = vmatprep.subr.bf16.mxu0 %v414
  %715 = vmatpush1.bf16.msra.mxu0 %v413
  %716 = vmatprep.subr.bf16.mxu0 %v398
  %717 = vmatpush1.bf16.msra.mxu0 %v397
  %718 = vmatprep.subr.bf16.mxu0 %v382
  %719 = vmatpush1.bf16.msra.mxu0 %v381
  %720 = vmatprep.subr.bf16.mxu0 %v366
  %721 = vmatpush1.bf16.msra.mxu0 %v365
  %722 = vmatprep.subr.bf16.mxu0 %v350
  %723 = vmatpush1.bf16.msra.mxu0 %v349
  %724 = vmatprep.subr.bf16.mxu0 0
  %725 = vmatpush2.bf16.msra.mxu0 0
  %726 = vmatprep.subr.bf16.mxu0 0
  %727 = vmatpush2.bf16.msra.mxu0 0
  %728 = vmatprep.subr.bf16.mxu0 0
  %729 = vmatpush2.bf16.msra.mxu0 0
  %730 = vmatprep.subr.bf16.mxu0 0
  %731 = vmatpush2.bf16.msra.mxu0 0
  %732 = vmatprep.subr.bf16.mxu0 0
  %733 = vmatpush2.bf16.msra.mxu0 0
  %734 = vmatprep.subr.bf16.mxu0 0
  %735 = vmatpush2.bf16.msra.mxu0 0
  %736 = vmatprep.subr.bf16.mxu0 0
  %737 = vmatpush2.bf16.msra.mxu0 0
  %738 = vmatprep.subr.bf16.mxu0 0
  %739 = vmatpush2.bf16.msra.mxu0 0
  %740 = vmatprep.mubr.bf16.mxu0 0
  %741 = vmatmul.mubr.bf16.gmra.mxu0 %v501
  %v742 = vpop.f32.mrf.mxu0
  %v743 = vadd.f32 0.0, %v742
  %v744 = vpop.f32.mrf.mxu0
  %v745 = vadd.f32 0.0, %v744
  %v746 = vpop.f32.mrf.mxu0
  %v747 = vpop.f32.mrf.mxu0
  %748 = vdwg.mxu0
  %749 = vmatprep.subr.bf16.mxu0 0
  %750 = vmatpush1.bf16.msra.mxu0 0
  %751 = vmatprep.subr.bf16.mxu0 0
  %752 = vmatpush1.bf16.msra.mxu0 0
  %753 = vmatprep.subr.bf16.mxu0 0
  %754 = vmatpush1.bf16.msra.mxu0 0
  %755 = vmatprep.subr.bf16.mxu0 %v416
  %756 = vmatpush1.bf16.msra.mxu0 %v415
  %757 = vmatprep.subr.bf16.mxu0 %v400
  %758 = vmatpush1.bf16.msra.mxu0 %v399
  %759 = vmatprep.subr.bf16.mxu0 %v384
  %760 = vmatpush1.bf16.msra.mxu0 %v383
  %761 = vmatprep.subr.bf16.mxu0 %v368
  %762 = vmatpush1.bf16.msra.mxu0 %v367
  %763 = vmatprep.subr.bf16.mxu0 %v352
  %764 = vmatpush1.bf16.msra.mxu0 %v351
  %765 = vmatprep.subr.bf16.mxu0 0
  %766 = vmatpush2.bf16.msra.mxu0 0
  %767 = vmatprep.subr.bf16.mxu0 0
  %768 = vmatpush2.bf16.msra.mxu0 0
  %769 = vmatprep.subr.bf16.mxu0 0
  %770 = vmatpush2.bf16.msra.mxu0 0
  %771 = vmatprep.subr.bf16.mxu0 0
  %772 = vmatpush2.bf16.msra.mxu0 0
  %773 = vmatprep.subr.bf16.mxu0 0
  %774 = vmatpush2.bf16.msra.mxu0 0
  %775 = vmatprep.subr.bf16.mxu0 0
  %776 = vmatpush2.bf16.msra.mxu0 0
  %777 = vmatprep.subr.bf16.mxu0 0
  %778 = vmatpush2.bf16.msra.mxu0 0
  %779 = vmatprep.subr.bf16.mxu0 0
  %780 = vmatpush2.bf16.msra.mxu0 0
  %781 = vmatprep.mubr.bf16.mxu0 0
  %782 = vmatmul.mubr.bf16.gmra.mxu0 %v501
  %v783 = vpop.f32.mrf.mxu0
  %v784 = vadd.f32 0.0, %v783
  %v785 = vpop.f32.mrf.mxu0
  %v786 = vadd.f32 0.0, %v785
  %v787 = vpop.f32.mrf.mxu0
  %v788 = vpop.f32.mrf.mxu0
  %789 = vdwg.mxu0
  %790 = vmatprep.subr.bf16.mxu0 0
  %791 = vmatpush1.bf16.msra.mxu0 0
  %792 = vmatprep.subr.bf16.mxu0 0
  %793 = vmatpush1.bf16.msra.mxu0 0
  %794 = vmatprep.subr.bf16.mxu0 0
  %795 = vmatpush1.bf16.msra.mxu0 0
  %796 = vmatprep.subr.bf16.mxu0 %v418
  %797 = vmatpush1.bf16.msra.mxu0 %v417
  %798 = vmatprep.subr.bf16.mxu0 %v402
  %799 = vmatpush1.bf16.msra.mxu0 %v401
  %800 = vmatprep.subr.bf16.mxu0 %v386
  %801 = vmatpush1.bf16.msra.mxu0 %v385
  %802 = vmatprep.subr.bf16.mxu0 %v370
  %803 = vmatpush1.bf16.msra.mxu0 %v369
  %804 = vmatprep.subr.bf16.mxu0 %v354
  %805 = vmatpush1.bf16.msra.mxu0 %v353
  %806 = vmatprep.subr.bf16.mxu0 0
  %807 = vmatpush2.bf16.msra.mxu0 0
  %808 = vmatprep.subr.bf16.mxu0 0
  %809 = vmatpush2.bf16.msra.mxu0 0
  %810 = vmatprep.subr.bf16.mxu0 0
  %811 = vmatpush2.bf16.msra.mxu0 0
  %812 = vmatprep.subr.bf16.mxu0 0
  %813 = vmatpush2.bf16.msra.mxu0 0
  %814 = vmatprep.subr.bf16.mxu0 0
  %815 = vmatpush2.bf16.msra.mxu0 0
  %816 = vmatprep.subr.bf16.mxu0 0
  %817 = vmatpush2.bf16.msra.mxu0 0
  %818 = vmatprep.subr.bf16.mxu0 0
  %819 = vmatpush2.bf16.msra.mxu0 0
  %820 = vmatprep.subr.bf16.mxu0 0
  %821 = vmatpush2.bf16.msra.mxu0 0
  %822 = vmatprep.mubr.bf16.mxu0 0
  %823 = vmatmul.mubr.bf16.gmra.mxu0 %v501
  %v824 = vpop.f32.mrf.mxu0
  %v825 = vadd.f32 0.0, %v824
  %v826 = vpop.f32.mrf.mxu0
  %v827 = vadd.f32 0.0, %v826
  %v828 = vpop.f32.mrf.mxu0
  %v829 = vpop.f32.mrf.mxu0
  %830 = vdwg.mxu0
  %vm831 = vcmask 1045504
  %v832 = vsel %vm831, %v538, 0.0
  %v833 = vsel %vm831, %v540, 0.0
  %v834 = vadd.f32 %v832, %v833
  %v835 = vsel %vm831, %v579, 0.0
  %v836 = vadd.f32 %v834, %v835
  %v837 = vsel %vm831, %v581, 0.0
  %v838 = vadd.f32 %v836, %v837
  %v839 = vsel %vm831, %v620, 0.0
  %v840 = vadd.f32 %v838, %v839
  %v841 = vsel %vm831, %v622, 0.0
  %v842 = vadd.f32 %v840, %v841
  %v843 = vsel %vm831, %v661, 0.0
  %v844 = vadd.f32 %v842, %v843
  %v845 = vsel %vm831, %v663, 0.0
  %v846 = vadd.f32 %v844, %v845
  %v847 = vsel %vm831, %v702, 0.0
  %v848 = vadd.f32 %v846, %v847
  %v849 = vsel %vm831, %v704, 0.0
  %v850 = vadd.f32 %v848, %v849
  %v851 = vsel %vm831, %v743, 0.0
  %v852 = vadd.f32 %v850, %v851
  %v853 = vsel %vm831, %v745, 0.0
  %v854 = vadd.f32 %v852, %v853
  %v855 = vsel %vm831, %v784, 0.0
  %v856 = vadd.f32 %v854, %v855
  %v857 = vsel %vm831, %v786, 0.0
  %v858 = vadd.f32 %v856, %v857
  %v859 = vsel %vm831, %v825, 0.0
  %v860 = vadd.f32 %v858, %v859
  %v861 = vsel %vm831, %v827, 0.0
  %v862 = vadd.f32 %v860, %v861
  %863 = vadd.xlane.f32.xlu0 %v862
  %v864 = vpop.xlane.xlu0 %863
  %v865 = vrcp.pop 1568.0
  %v866 = vmul.f32 %v864, %v865
  %v867 = vmul.f32 %v538, %v538
  %v868 = vmul.f32 %v540, %v540
  %v869 = vmul.f32 %v579, %v579
  %v870 = vmul.f32 %v581, %v581
  %v871 = vmul.f32 %v620, %v620
  %v872 = vmul.f32 %v622, %v622
  %v873 = vmul.f32 %v661, %v661
  %v874 = vmul.f32 %v663, %v663
  %v875 = vmul.f32 %v702, %v702
  %v876 = vmul.f32 %v704, %v704
  %v877 = vmul.f32 %v743, %v743
  %v878 = vmul.f32 %v745, %v745
  %v879 = vmul.f32 %v784, %v784
  %v880 = vmul.f32 %v786, %v786
  %v881 = vmul.f32 %v825, %v825
  %v882 = vmul.f32 %v827, %v827
  %v883 = vsel %vm831, %v867, 0.0
  %v884 = vsel %vm831, %v868, 0.0
  %v885 = vadd.f32 %v883, %v884
  %v886 = vsel %vm831, %v869, 0.0
  %v887 = vadd.f32 %v885, %v886
  %v888 = vsel %vm831, %v870, 0.0
  %v889 = vadd.f32 %v887, %v888
  %v890 = vsel %vm831, %v871, 0.0
  %v891 = vadd.f32 %v889, %v890
  %v892 = vsel %vm831, %v872, 0.0
  %v893 = vadd.f32 %v891, %v892
  %v894 = vsel %vm831, %v873, 0.0
  %v895 = vadd.f32 %v893, %v894
  %v896 = vsel %vm831, %v874, 0.0
  %v897 = vadd.f32 %v895, %v896
  %v898 = vsel %vm831, %v875, 0.0
  %v899 = vadd.f32 %v897, %v898
  %v900 = vsel %vm831, %v876, 0.0
  %v901 = vadd.f32 %v899, %v900
  %v902 = vsel %vm831, %v877, 0.0
  %v903 = vadd.f32 %v901, %v902
  %v904 = vsel %vm831, %v878, 0.0
  %v905 = vadd.f32 %v903, %v904
  %v906 = vsel %vm831, %v879, 0.0
  %v907 = vadd.f32 %v905, %v906
  %v908 = vsel %vm831, %v880, 0.0
  %v909 = vadd.f32 %v907, %v908
  %v910 = vsel %vm831, %v881, 0.0
  %v911 = vadd.f32 %v909, %v910
  %v912 = vsel %vm831, %v882, 0.0
  %v913 = vadd.f32 %v911, %v912
  %914 = vadd.xlane.f32.xlu0 %v913
  %v915 = vpop.xlane.xlu0 %914
  %v916 = vmul.f32 %v915, %v865
  %v917 = vmul.f32 %v866, %v866
  %v918 = vsub.f32 %v916, %v917
  %v919 = vld [vmem:[%s2] sm:$0x3f]
  %v920 = vadd.f32 %v918, 1e-05
  %v921 = vrsqrt.pop %v920
  %v922 = vmul.f32 %v919, %v921
  %v923 = vld [vmem:[%s3] sm:$0x3f]
  %v924 = vmul.f32 %v866, %v922
  %v925 = vsub.f32 %v923, %v924
  %927 = vset.pattern.permute.xlu0 0
  %928 = vperm.xlu0 %927, %v922
  %v929 = vpop.permute.xlu0 %928
  %v931 = vmul.f32 %v538, %v929
  %v932 = vmul.f32 %v540, %v929
  %v933 = vmul.f32 %v579, %v929
  %v934 = vmul.f32 %v581, %v929
  %936 = vset.pattern.permute.xlu0 0
  %937 = vperm.xlu0 %936, %v925
  %v938 = vpop.permute.xlu0 %937
  %v940 = vadd.f32 %v931, %v938
  %v941 = vadd.f32 %v932, %v938
  %v942 = vadd.f32 %v933, %v938
  %v943 = vadd.f32 %v934, %v938
  %v944 = vmax.f32 %v940, 0.0
  %v945 = vmax.f32 %v941, 0.0
  %v946 = vmax.f32 %v942, 0.0
  %v947 = vmax.f32 %v943, 0.0
  %v948 = vmul.f32 %v620, %v929
  %v949 = vmul.f32 %v622, %v929
  %v950 = vmul.f32 %v661, %v929
  %v951 = vmul.f32 %v663, %v929
  %v952 = vadd.f32 %v948, %v938
  %v953 = vadd.f32 %v949, %v938
  %v954 = vadd.f32 %v950, %v938
  %v955 = vadd.f32 %v951, %v938
  %v956 = vmax.f32 %v952, 0.0
  %v957 = vmax.f32 %v953, 0.0
  %v958 = vmax.f32 %v954, 0.0
  %v959 = vmax.f32 %v955, 0.0
  %v960 = vmax.f32 %v944, %v956
  %v961 = vmax.f32 %v945, %v957
  %v962 = vmax.f32 %v946, %v958
  %v963 = vmax.f32 %v947, %v959
  %v964 = vmul.f32 %v702, %v929
  %v965 = vmul.f32 %v704, %v929
  %v966 = vmul.f32 %v743, %v929
  %v967 = vmul.f32 %v745, %v929
  %v968 = vadd.f32 %v964, %v938
  %v969 = vadd.f32 %v965, %v938
  %v970 = vadd.f32 %v966, %v938
  %v971 = vadd.f32 %v967, %v938
  %v972 = vmax.f32 %v968, 0.0
  %v973 = vmax.f32 %v969, 0.0
  %v974 = vmax.f32 %v970, 0.0
  %v975 = vmax.f32 %v971, 0.0
  %v976 = vmax.f32 %v960, %v972
  %v977 = vmax.f32 %v961, %v973
  %v978 = vmax.f32 %v962, %v974
  %v979 = vmax.f32 %v963, %v975
  %v980 = vmul.f32 %v784, %v929
  %v981 = vmul.f32 %v786, %v929
  %v982 = vmul.f32 %v825, %v929
  %v983 = vmul.f32 %v827, %v929
  %v984 = vadd.f32 %v980, %v938
  %v985 = vadd.f32 %v981, %v938
  %v986 = vadd.f32 %v982, %v938
  %v987 = vadd.f32 %v983, %v938
  %v988 = vmax.f32 %v984, 0.0
  %v989 = vmax.f32 %v985, 0.0
  %v990 = vmax.f32 %v986, 0.0
  %v991 = vmax.f32 %v987, 0.0
  %v992 = vmax.f32 %v976, %v988
  %v993 = vmax.f32 %v977, %v989
  %v994 = vmax.f32 %v978, %v990
  %v995 = vmax.f32 %v979, %v991
  %996 = vst [vmem:[%s4] sm:$0x3f] %v992
  %997 = vst [vmem:[%s4 + $0x8] sm:$0x3f] %v993
  %998 = vst [vmem:[%s4 + $0x10] sm:$0x3f] %v994
  %999 = vst [vmem:[%s4 + $0x18] sm:$0x3f] %v995
  // Predicated region
  $region18: #{lenet_forward.3} parent=0 // pred_check
    _
  $region19: #{lenet_forward.3} parent=0 // pred_check_branch
    %1001 = sbr.rel (0) target = $region21
  $region20: #{lenet_forward.3} parent=0 // pred_region
    _
  $region21: #{lenet_forward.3} parent=0 // pred_fallthru
    _
  // Predicated region
  $region22: #{lenet_forward.3} parent=0 // pred_check
    _
  $region23: #{lenet_forward.3} parent=0 // pred_check_branch
    %1003 = sbr.rel (0) target = $region25
  $region24: #{lenet_forward.3} parent=0 // pred_region
    _
  $region25: #{lenet_forward.3} parent=0 // pred_fallthru
    _

// kernel: lenet_forward.4
$region0: #{lenet_forward.4}
  #allocation0 [shape = 'u32[]', space=smem, size = 0x4, offset = 0x4, fixed_abs, tag = 'smem constant byte address 0x4 - core index']
  #allocation1 [shape = 'u32[144,128]{1,0:T(1,128)}', space=vmem, size = 0x12000, scoped, tag = 'internal scratch']
  %s0 = inlined_call_operand.vmem [shape: bf16[160,512], index: 0, kind: input, shape index: {}]
  %s1 = inlined_call_operand.vmem [shape: bf16[16,160], index: 1, kind: input, shape index: {}]
  %s2 = inlined_call_operand.vmem [shape: f32[16,1], index: 2, kind: input, shape index: {}]
  %s3 = inlined_call_operand.vmem [shape: f32[16,1], index: 3, kind: input, shape index: {}]
  %s4 = inlined_call_operand.vmem [shape: f32[16,128], index: 4, kind: output, shape index: {}]
  %s5 = sld [smem:[#allocation0]]
  $region26: #{lenet_forward.4} parent=0
    _
  %s7 = ssub.s32 1, %s5
  %s8 = scalar_select 0, %s7, %s5
  // Predicated region
  $region2: #{lenet_forward.4} parent=0 // pred_check
    _
  $region3: #{lenet_forward.4} parent=0 // pred_check_branch
    %10 = sbr.rel (0) target = $region5
  $region4: #{lenet_forward.4} parent=0 // pred_region
    _
  $region5: #{lenet_forward.4} parent=0 // pred_fallthru
    _
  // Predicated region
  $region6: #{lenet_forward.4} parent=0 // pred_check
    _
  $region7: #{lenet_forward.4} parent=0 // pred_check_branch
    %12 = sbr.rel (0) target = $region9
  $region8: #{lenet_forward.4} parent=0 // pred_region
    _
  $region9: #{lenet_forward.4} parent=0 // pred_fallthru
    _
  // Predicated region
  $region10: #{lenet_forward.4} parent=0 // pred_check
    _
  $region11: #{lenet_forward.4} parent=0 // pred_check_branch
    %14 = sbr.rel (0) target = $region13
  $region12: #{lenet_forward.4} parent=0 // pred_region
    _
  $region13: #{lenet_forward.4} parent=0 // pred_fallthru
    _
  // Predicated region
  $region14: #{lenet_forward.4} parent=0 // pred_check
    _
  $region15: #{lenet_forward.4} parent=0 // pred_check_branch
    %16 = sbr.rel (0) target = $region17
  $region16: #{lenet_forward.4} parent=0 // pred_region
    _
  $region17: #{lenet_forward.4} parent=0 // pred_fallthru
    _
  %v18 = vld [vmem:[%s1] sm:$0xff]
  %v19 = vld [vmem:[%s1 + $0x8] sm:$0xff]
  %v20 = vld [vmem:[%s0] sm:$0xff]
  %v21 = vld [vmem:[%s0 + $0x8] sm:$0xff]
  %v22 = vld [vmem:[%s0 + $0x10] sm:$0xff]
  %v23 = vld [vmem:[%s0 + $0x18] sm:$0xff]
  %v24 = vld [vmem:[%s0 + $0x20] sm:$0xff]
  %v25 = vld [vmem:[%s0 + $0x28] sm:$0xff]
  %v26 = vld [vmem:[%s0 + $0x30] sm:$0xff]
  %v27 = vld [vmem:[%s0 + $0x38] sm:$0xff]
  %v28 = vld [vmem:[%s0 + $0x40] sm:$0xff]
  %v29 = vld [vmem:[%s0 + $0x48] sm:$0xff]
  %v30 = vld [vmem:[%s0 + $0x50] sm:$0xff]
  %v31 = vld [vmem:[%s0 + $0x58] sm:$0xff]
  %v32 = vld [vmem:[%s0 + $0x60] sm:$0xff]
  %v33 = vld [vmem:[%s0 + $0x68] sm:$0xff]
  %v34 = vld [vmem:[%s0 + $0x70] sm:$0xff]
  %v35 = vld [vmem:[%s0 + $0x78] sm:$0xff]
  %v36 = vld [vmem:[%s0 + $0x80] sm:$0xff]
  %v37 = vld [vmem:[%s0 + $0x88] sm:$0xff]
  %v38 = vld [vmem:[%s0 + $0x90] sm:$0xff]
  %v39 = vld [vmem:[%s0 + $0x98] sm:$0xff]
  %v40 = vld [vmem:[%s0 + $0xa0] sm:$0xff]
  %v41 = vld [vmem:[%s0 + $0xa8] sm:$0xff]
  %v42 = vld [vmem:[%s0 + $0xb0] sm:$0xff]
  %v43 = vld [vmem:[%s0 + $0xb8] sm:$0xff]
  %v44 = vld [vmem:[%s0 + $0xc0] sm:$0xff]
  %v45 = vld [vmem:[%s0 + $0xc8] sm:$0xff]
  %v46 = vld [vmem:[%s0 + $0xd0] sm:$0xff]
  %v47 = vld [vmem:[%s0 + $0xd8] sm:$0xff]
  %v48 = vld [vmem:[%s0 + $0xe0] sm:$0xff]
  %v49 = vld [vmem:[%s0 + $0xe8] sm:$0xff]
  %v50 = vld [vmem:[%s0 + $0xf0] sm:$0xff]
  %v51 = vld [vmem:[%s0 + $0xf8] sm:$0xff]
  %v52 = vld [vmem:[%s0 + $0x100] sm:$0xff]
  %v53 = vld [vmem:[%s0 + $0x108] sm:$0xff]
  %v54 = vld [vmem:[%s0 + $0x110] sm:$0xff]
  %v55 = vld [vmem:[%s0 + $0x118] sm:$0xff]
  %v56 = vld [vmem:[%s0 + $0x120] sm:$0xff]
  %v57 = vld [vmem:[%s0 + $0x128] sm:$0xff]
  %v58 = vld [vmem:[%s0 + $0x130] sm:$0xff]
  %v59 = vld [vmem:[%s0 + $0x138] sm:$0xff]
  %v62 = vunpack.c.l.b16 %v18
  %v63 = vunpack.c.h.b16 %v18
  %v64 = vunpack.c.l.b16 %v19
  %v65 = vunpack.c.h.b16 %v19
  %v66 = vpack.c.b16 %v64, %v62
  %v67 = vpack.c.b16 %v65, %v63
  %v109 = vunpack.c.l.b16 %v20
  %v110 = vunpack.c.h.b16 %v20
  %v111 = vunpack.c.l.b16 %v21
  %v112 = vunpack.c.h.b16 %v21
  %v113 = vunpack.c.l.b16 %v22
  %v114 = vunpack.c.h.b16 %v22
  %v115 = vunpack.c.l.b16 %v23
  %v116 = vunpack.c.h.b16 %v23
  %v117 = vunpack.c.l.b16 %v24
  %v118 = vunpack.c.h.b16 %v24
  %v119 = vunpack.c.l.b16 %v25
  %v120 = vunpack.c.h.b16 %v25
  %v121 = vunpack.c.l.b16 %v26
  %v122 = vunpack.c.h.b16 %v26
  %v123 = vunpack.c.l.b16 %v27
  %v124 = vunpack.c.h.b16 %v27
  %v125 = vunpack.c.l.b16 %v28
  %v126 = vunpack.c.h.b16 %v28
  %v127 = vunpack.c.l.b16 %v29
  %v128 = vunpack.c.h.b16 %v29
  %v129 = vunpack.c.l.b16 %v30
  %v130 = vunpack.c.h.b16 %v30
  %v131 = vunpack.c.l.b16 %v31
  %v132 = vunpack.c.h.b16 %v31
  %v133 = vunpack.c.l.b16 %v32
  %v134 = vunpack.c.h.b16 %v32
  %v135 = vunpack.c.l.b16 %v33
  %v136 = vunpack.c.h.b16 %v33
  %v137 = vunpack.c.l.b16 %v34
  %v138 = vunpack.c.h.b16 %v34
  %v139 = vunpack.c.l.b16 %v35
  %v140 = vunpack.c.h.b16 %v35
  %v141 = vunpack.c.l.b16 %v36
  %v142 = vunpack.c.h.b16 %v36
  %v143 = vunpack.c.l.b16 %v37
  %v144 = vunpack.c.h.b16 %v37
  %v145 = vunpack.c.l.b16 %v38
  %v146 = vunpack.c.h.b16 %v38
  %v147 = vunpack.c.l.b16 %v39
  %v148 = vunpack.c.h.b16 %v39
  %v149 = vunpack.c.l.b16 %v40
  %v150 = vunpack.c.h.b16 %v40
  %v151 = vunpack.c.l.b16 %v41
  %v152 = vunpack.c.h.b16 %v41
  %v153 = vunpack.c.l.b16 %v42
  %v154 = vunpack.c.h.b16 %v42
  %v155 = vunpack.c.l.b16 %v43
  %v156 = vunpack.c.h.b16 %v43
  %v157 = vunpack.c.l.b16 %v44
  %v158 = vunpack.c.h.b16 %v44
  %v159 = vunpack.c.l.b16 %v45
  %v160 = vunpack.c.h.b16 %v45
  %v161 = vunpack.c.l.b16 %v46
  %v162 = vunpack.c.h.b16 %v46
  %v163 = vunpack.c.l.b16 %v47
  %v164 = vunpack.c.h.b16 %v47
  %v165 = vunpack.c.l.b16 %v48
  %v166 = vunpack.c.h.b16 %v48
  %v167 = vunpack.c.l.b16 %v49
  %v168 = vunpack.c.h.b16 %v49
  %v169 = vunpack.c.l.b16 %v50
  %v170 = vunpack.c.h.b16 %v50
  %v171 = vunpack.c.l.b16 %v51
  %v172 = vunpack.c.h.b16 %v51
  %v173 = vunpack.c.l.b16 %v52
  %v174 = vunpack.c.h.b16 %v52
  %v175 = vunpack.c.l.b16 %v53
  %v176 = vunpack.c.h.b16 %v53
  %v177 = vunpack.c.l.b16 %v54
  %v178 = vunpack.c.h.b16 %v54
  %v179 = vunpack.c.l.b16 %v55
  %v180 = vunpack.c.h.b16 %v55
  %v181 = vunpack.c.l.b16 %v56
  %v182 = vunpack.c.h.b16 %v56
  %v183 = vunpack.c.l.b16 %v57
  %v184 = vunpack.c.h.b16 %v57
  %v185 = vunpack.c.l.b16 %v58
  %v186 = vunpack.c.h.b16 %v58
  %v187 = vunpack.c.l.b16 %v59
  %v188 = vunpack.c.h.b16 %v59
  %v189 = vpack.c.b16 %v113, %v109
  %v190 = vpack.c.b16 %v114, %v110
  %v191 = vpack.c.b16 %v115, %v111
  %v192 = vpack.c.b16 %v116, %v112
  %v193 = vpack.c.b16 %v121, %v117
  %v194 = vpack.c.b16 %v122, %v118
  %v195 = vpack.c.b16 %v123, %v119
  %v196 = vpack.c.b16 %v124, %v120
  %v197 = vpack.c.b16 %v129, %v125
  %v198 = vpack.c.b16 %v130, %v126
  %v199 = vpack.c.b16 %v131, %v127
  %v200 = vpack.c.b16 %v132, %v128
  %v201 = vpack.c.b16 %v137, %v133
  %v202 = vpack.c.b16 %v138, %v134
  %v203 = vpack.c.b16 %v139, %v135
  %v204 = vpack.c.b16 %v140, %v136
  %v205 = vpack.c.b16 %v145, %v141
  %v206 = vpack.c.b16 %v146, %v142
  %v207 = vpack.c.b16 %v147, %v143
  %v208 = vpack.c.b16 %v148, %v144
  %v209 = vpack.c.b16 %v153, %v149
  %v210 = vpack.c.b16 %v154, %v150
  %v211 = vpack.c.b16 %v155, %v151
  %v212 = vpack.c.b16 %v156, %v152
  %v213 = vpack.c.b16 %v161, %v157
  %v214 = vpack.c.b16 %v162, %v158
  %v215 = vpack.c.b16 %v163, %v159
  %v216 = vpack.c.b16 %v164, %v160
  %v217 = vpack.c.b16 %v169, %v165
  %v218 = vpack.c.b16 %v170, %v166
  %v219 = vpack.c.b16 %v171, %v167
  %v220 = vpack.c.b16 %v172, %v168
  %v221 = vpack.c.b16 %v177, %v173
  %v222 = vpack.c.b16 %v178, %v174
  %v223 = vpack.c.b16 %v179, %v175
  %v224 = vpack.c.b16 %v180, %v176
  %v225 = vpack.c.b16 %v185, %v181
  %v226 = vpack.c.b16 %v186, %v182
  %v227 = vpack.c.b16 %v187, %v183
  %v228 = vpack.c.b16 %v188, %v184
  %vm269 = vcmask 261120
  %v271 = vsel %vm269, %v67, 0
  %273 = vmatprep.subr.bf16.mxu0 %v218
  %274 = vmatpush1.bf16.msra.mxu0 %v217
  %275 = vmatprep.subr.bf16.mxu0 %v214
  %276 = vmatpush1.bf16.msra.mxu0 %v213
  %277 = vmatprep.subr.bf16.mxu0 %v210
  %278 = vmatpush1.bf16.msra.mxu0 %v209
  %279 = vmatprep.subr.bf16.mxu0 %v206
  %280 = vmatpush1.bf16.msra.mxu0 %v205
  %281 = vmatprep.subr.bf16.mxu0 %v202
  %282 = vmatpush1.bf16.msra.mxu0 %v201
  %283 = vmatprep.subr.bf16.mxu0 %v198
  %284 = vmatpush1.bf16.msra.mxu0 %v197
  %285 = vmatprep.subr.bf16.mxu0 %v194
  %286 = vmatpush1.bf16.msra.mxu0 %v193
  %287 = vmatprep.subr.bf16.mxu0 %v190
  %288 = vmatpush1.bf16.msra.mxu0 %v189
  %289 = vmatprep.subr.bf16.mxu0 0
  %290 = vmatpush2.bf16.msra.mxu0 0
  %291 = vmatprep.subr.bf16.mxu0 0
  %292 = vmatpush2.bf16.msra.mxu0 0
  %293 = vmatprep.subr.bf16.mxu0 0
  %294 = vmatpush2.bf16.msra.mxu0 0
  %295 = vmatprep.subr.bf16.mxu0 0
  %296 = vmatpush2.bf16.msra.mxu0 0
  %297 = vmatprep.subr.bf16.mxu0 0
  %298 = vmatpush2.bf16.msra.mxu0 0
  %299 = vmatprep.subr.bf16.mxu0 0
  %300 = vmatpush2.bf16.msra.mxu0 0
  %301 = vmatprep.subr.bf16.mxu0 %v226
  %302 = vmatpush2.bf16.msra.mxu0 %v225
  %303 = vmatprep.subr.bf16.mxu0 %v222
  %304 = vmatpush2.bf16.msra.mxu0 %v221
  %305 = vmatprep.mubr.bf16.mxu0 %v271
  %306 = vmatmul.mubr.bf16.gmra.mxu0 %v66
  %v307 = vpop.f32.mrf.mxu0
  %v308 = vadd.f32 0.0, %v307
  %v309 = vpop.f32.mrf.mxu0
  %v310 = vadd.f32 0.0, %v309
  %v311 = vpop.f32.mrf.mxu0
  %v312 = vadd.f32 0.0, %v311
  %v313 = vpop.f32.mrf.mxu0
  %v314 = vadd.f32 0.0, %v313
  %315 = vdwg.mxu0
  %316 = vmatprep.subr.bf16.mxu0 %v220
  %317 = vmatpush1.bf16.msra.mxu0 %v219
  %318 = vmatprep.subr.bf16.mxu0 %v216
  %319 = vmatpush1.bf16.msra.mxu0 %v215
  %320 = vmatprep.subr.bf16.mxu0 %v212
  %321 = vmatpush1.bf16.msra.mxu0 %v211
  %322 = vmatprep.subr.bf16.mxu0 %v208
  %323 = vmatpush1.bf16.msra.mxu0 %v207
  %324 = vmatprep.subr.bf16.mxu0 %v204
  %325 = vmatpush1.bf16.msra.mxu0 %v203
  %326 = vmatprep.subr.bf16.mxu0 %v200
  %327 = vmatpush1.bf16.msra.mxu0 %v199
  %328 = vmatprep.subr.bf16.mxu0 %v196
  %329 = vmatpush1.bf16.msra.mxu0 %v195
  %330 = vmatprep.subr.bf16.mxu0 %v192
  %331 = vmatpush1.bf16.msra.mxu0 %v191
  %332 = vmatprep.subr.bf16.mxu0 0
  %333 = vmatpush2.bf16.msra.mxu0 0
  %334 = vmatprep.subr.bf16.mxu0 0
  %335 = vmatpush2.bf16.msra.mxu0 0
  %336 = vmatprep.subr.bf16.mxu0 0
  %337 = vmatpush2.bf16.msra.mxu0 0
  %338 = vmatprep.subr.bf16.mxu0 0
  %339 = vmatpush2.bf16.msra.mxu0 0
  %340 = vmatprep.subr.bf16.mxu0 0
  %341 = vmatpush2.bf16.msra.mxu0 0
  %342 = vmatprep.subr.bf16.mxu0 0
  %343 = vmatpush2.bf16.msra.mxu0 0
  %344 = vmatprep.subr.bf16.mxu0 %v228
  %345 = vmatpush2.bf16.msra.mxu0 %v227
  %346 = vmatprep.subr.bf16.mxu0 %v224
  %347 = vmatpush2.bf16.msra.mxu0 %v223
  %348 = vmatprep.mubr.bf16.mxu0 %v271
  %349 = vmatmul.mubr.bf16.gmra.mxu0 %v66
  %v350 = vpop.f32.mrf.mxu0
  %v351 = vadd.f32 0.0, %v350
  %v352 = vpop.f32.mrf.mxu0
  %v353 = vadd.f32 0.0, %v352
  %v354 = vpop.f32.mrf.mxu0
  %v355 = vadd.f32 0.0, %v354
  %v356 = vpop.f32.mrf.mxu0
  %v357 = vadd.f32 0.0, %v356
  %358 = vdwg.mxu0
  %v359 = vadd.f32 %v308, %v310
  %v360 = vadd.f32 %v359, %v351
  %v361 = vadd.f32 %v360, %v353
  %362 = vadd.xlane.f32.xlu0 %v361
  %v363 = vpop.xlane.xlu0 %362
  %v364 = vadd.f32 %v312, %v314
  %v365 = vadd.f32 %v364, %v355
  %v366 = vadd.f32 %v365, %v357
  %367 = vadd.xlane.f32.xlu0 %v366
  %v368 = vpop.xlane.xlu0 %367
  %v369 = vrcp.pop 200.0
  %v370 = vmul.f32 %v363, %v369
  %v371 = vmul.f32 %v368, %v369
  %v372 = vmul.f32 %v308, %v308
  %v373 = vmul.f32 %v310, %v310
  %v374 = vmul.f32 %v351, %v351
  %v375 = vmul.f32 %v353, %v353
  %v376 = vmul.f32 %v312, %v312
  %v377 = vmul.f32 %v314, %v314
  %v378 = vmul.f32 %v355, %v355
  %v379 = vmul.f32 %v357, %v357
  %v380 = vadd.f32 %v372, %v373
  %v381 = vadd.f32 %v380, %v374
  %v382 = vadd.f32 %v381, %v375
  %383 = vadd.xlane.f32.xlu0 %v382
  %v384 = vpop.xlane.xlu0 %383
  %v385 = vadd.f32 %v376, %v377
  %v386 = vadd.f32 %v385, %v378
  %v387 = vadd.f32 %v386, %v379
  %388 = vadd.xlane.f32.xlu0 %v387
  %v389 = vpop.xlane.xlu0 %388
  %v390 = vmul.f32 %v384, %v369
  %v391 = vmul.f32 %v389, %v369
  %v392 = vmul.f32 %v370, %v370
  %v393 = vmul.f32 %v371, %v371
  %v394 = vsub.f32 %v390, %v392
  %v395 = vsub.f32 %v391, %v393
  %v396 = vld [vmem:[%s2] sm:$0xff]
  %v397 = vld [vmem:[%s2 + $0x8] sm:$0xff]
  %v398 = vadd.f32 %v394, 1e-05
  %v399 = vadd.f32 %v395, 1e-05
  %v400 = vrsqrt.pop %v398
  %v401 = vrsqrt.pop %v399
  %v402 = vmul.f32 %v396, %v400
  %v403 = vmul.f32 %v397, %v401
  %v404 = vld [vmem:[%s3] sm:$0xff]
  %v405 = vld [vmem:[%s3 + $0x8] sm:$0xff]
  %v406 = vmul.f32 %v370, %v402
  %v407 = vmul.f32 %v371, %v403
  %v408 = vsub.f32 %v404, %v406
  %v409 = vsub.f32 %v405, %v407
  %411 = vset.pattern.permute.xlu0 0
  %412 = vperm.xlu0 %411, %v402
  %v413 = vpop.permute.xlu0 %412
  %416 = vset.pattern.permute.xlu0 0
  %417 = vperm.xlu0 %416, %v403
  %v418 = vpop.permute.xlu0 %417
  %v420 = vmul.f32 %v308, %v413
  %v421 = vmul.f32 %v312, %v418
  %423 = vset.pattern.permute.xlu0 0
  %424 = vperm.xlu0 %423, %v408
  %v425 = vpop.permute.xlu0 %424
  %428 = vset.pattern.permute.xlu0 0
  %429 = vperm.xlu0 %428, %v409
  %v430 = vpop.permute.xlu0 %429
  %v432 = vadd.f32 %v420, %v425
  %v433 = vadd.f32 %v421, %v430
  %v434 = vmax.f32 %v432, 0.0
  %v435 = vmax.f32 %v433, 0.0
  %v436 = vmul.f32 %v310, %v413
  %v437 = vmul.f32 %v314, %v418
  %v438 = vadd.f32 %v436, %v425
  %v439 = vadd.f32 %v437, %v430
  %v440 = vmax.f32 %v438, 0.0
  %v441 = vmax.f32 %v439, 0.0
  %v442 = vmax.f32 %v434, %v440
  %v443 = vmax.f32 %v435, %v441
  %v444 = vmul.f32 %v351, %v413
  %v445 = vmul.f32 %v355, %v418
  %v446 = vadd.f32 %v444, %v425
  %v447 = vadd.f32 %v445, %v430
  %v448 = vmax.f32 %v446, 0.0
  %v449 = vmax.f32 %v447, 0.0
  %v450 = vmax.f32 %v442, %v448
  %v451 = vmax.f32 %v443, %v449
  %v452 = vmul.f32 %v353, %v413
  %v453 = vmul.f32 %v357, %v418
  %v454 = vadd.f32 %v452, %v425
  %v455 = vadd.f32 %v453, %v430
  %v456 = vmax.f32 %v454, 0.0
  %v457 = vmax.f32 %v455, 0.0
  %v458 = vmax.f32 %v450, %v456
  %v459 = vmax.f32 %v451, %v457
  %460 = vst [vmem:[%s4] sm:$0xff] %v458
  %461 = vst [vmem:[%s4 + $0x8] sm:$0xff] %v459
  // Predicated region
  $region18: #{lenet_forward.4} parent=0 // pred_check
    _
  $region19: #{lenet_forward.4} parent=0 // pred_check_branch
    %463 = sbr.rel (0) target = $region21
  $region20: #{lenet_forward.4} parent=0 // pred_region
    _
  $region21: #{lenet_forward.4} parent=0 // pred_fallthru
    _
  // Predicated region
  $region22: #{lenet_forward.4} parent=0 // pred_check
    _
  $region23: #{lenet_forward.4} parent=0 // pred_check_branch
    %465 = sbr.rel (0) target = $region25
  $region24: #{lenet_forward.4} parent=0 // pred_region
    _
  $region25: #{lenet_forward.4} parent=0 // pred_fallthru
    _

// kernel: lenet_forward.5
$region0: #{lenet_forward.5}
  #allocation0 [shape = 'u32[]', space=smem, size = 0x4, offset = 0x4, fixed_abs, tag = 'smem constant byte address 0x4 - core index']
  #allocation1 [shape = 'u32[144,128]{1,0:T(1,128)}', space=vmem, size = 0x12000, scoped, tag = 'internal scratch']
  %s0 = inlined_call_operand.vmem [shape: bf16[8,512], index: 0, kind: input, shape index: {}]
  %s1 = inlined_call_operand.vmem [shape: bf16[512,128], index: 1, kind: input, shape index: {}]
  %s2 = inlined_call_operand.vmem [shape: f32[1,128], index: 2, kind: input, shape index: {}]
  %s3 = inlined_call_operand.vmem [shape: bf16[128,128], index: 3, kind: input, shape index: {}]
  %s4 = inlined_call_operand.vmem [shape: f32[1,128], index: 4, kind: input, shape index: {}]
  %s5 = inlined_call_operand.vmem [shape: bf16[128,128], index: 5, kind: input, shape index: {}]
  %s6 = inlined_call_operand.vmem [shape: f32[1,128], index: 6, kind: input, shape index: {}]
  %s7 = inlined_call_operand.vmem [shape: f32[8,128], index: 7, kind: output, shape index: {}]
  %s8 = sld [smem:[#allocation0]]
  $region38: #{lenet_forward.5} parent=0
    _
  %s10 = ssub.s32 1, %s8
  %s11 = scalar_select 0, %s10, %s8
  // Predicated region
  $region2: #{lenet_forward.5} parent=0 // pred_check
    _
  $region3: #{lenet_forward.5} parent=0 // pred_check_branch
    %13 = sbr.rel (0) target = $region5
  $region4: #{lenet_forward.5} parent=0 // pred_region
    _
  $region5: #{lenet_forward.5} parent=0 // pred_fallthru
    _
  // Predicated region
  $region6: #{lenet_forward.5} parent=0 // pred_check
    _
  $region7: #{lenet_forward.5} parent=0 // pred_check_branch
    %15 = sbr.rel (0) target = $region9
  $region8: #{lenet_forward.5} parent=0 // pred_region
    _
  $region9: #{lenet_forward.5} parent=0 // pred_fallthru
    _
  // Predicated region
  $region10: #{lenet_forward.5} parent=0 // pred_check
    _
  $region11: #{lenet_forward.5} parent=0 // pred_check_branch
    %17 = sbr.rel (0) target = $region13
  $region12: #{lenet_forward.5} parent=0 // pred_region
    _
  $region13: #{lenet_forward.5} parent=0 // pred_fallthru
    _
  // Predicated region
  $region14: #{lenet_forward.5} parent=0 // pred_check
    _
  $region15: #{lenet_forward.5} parent=0 // pred_check_branch
    %19 = sbr.rel (0) target = $region17
  $region16: #{lenet_forward.5} parent=0 // pred_region
    _
  $region17: #{lenet_forward.5} parent=0 // pred_fallthru
    _
  // Predicated region
  $region18: #{lenet_forward.5} parent=0 // pred_check
    _
  $region19: #{lenet_forward.5} parent=0 // pred_check_branch
    %21 = sbr.rel (0) target = $region21
  $region20: #{lenet_forward.5} parent=0 // pred_region
    _
  $region21: #{lenet_forward.5} parent=0 // pred_fallthru
    _
  // Predicated region
  $region22: #{lenet_forward.5} parent=0 // pred_check
    _
  $region23: #{lenet_forward.5} parent=0 // pred_check_branch
    %23 = sbr.rel (0) target = $region25
  $region24: #{lenet_forward.5} parent=0 // pred_region
    _
  $region25: #{lenet_forward.5} parent=0 // pred_fallthru
    _
  // Predicated region
  $region26: #{lenet_forward.5} parent=0 // pred_check
    _
  $region27: #{lenet_forward.5} parent=0 // pred_check_branch
    %25 = sbr.rel (0) target = $region29
  $region28: #{lenet_forward.5} parent=0 // pred_region
    _
  $region29: #{lenet_forward.5} parent=0 // pred_fallthru
    _
  %v27 = vld [vmem:[%s0] sm:$0xff]
  %v28 = vld [vmem:[%s0 + $0x8] sm:$0xff]
  %v29 = vld [vmem:[%s1] sm:$0xf]
  %v30 = vld [vmem:[%s1 + $0x4] sm:$0xf]
  %v31 = vld [vmem:[%s1 + $0x8] sm:$0xf]
  %v32 = vld [vmem:[%s1 + $0xc] sm:$0xf]
  %v33 = vld [vmem:[%s1 + $0x10] sm:$0xf]
  %v34 = vld [vmem:[%s1 + $0x14] sm:$0xf]
  %v35 = vld [vmem:[%s1 + $0x18] sm:$0xf]
  %v36 = vld [vmem:[%s1 + $0x1c] sm:$0xf]
  %v37 = vld [vmem:[%s1 + $0x20] sm:$0xf]
  %v38 = vld [vmem:[%s1 + $0x24] sm:$0xf]
  %v39 = vld [vmem:[%s1 + $0x28] sm:$0xf]
  %v40 = vld [vmem:[%s1 + $0x2c] sm:$0xf]
  %v41 = vld [vmem:[%s1 + $0x30] sm:$0xf]
  %v42 = vld [vmem:[%s1 + $0x34] sm:$0xf]
  %v43 = vld [vmem:[%s1 + $0x38] sm:$0xf]
  %v44 = vld [vmem:[%s1 + $0x3c] sm:$0xf]
  %v45 = vld [vmem:[%s1 + $0x40] sm:$0xf]
  %v46 = vld [vmem:[%s1 + $0x44] sm:$0xf]
  %v47 = vld [vmem:[%s1 + $0x48] sm:$0xf]
  %v48 = vld [vmem:[%s1 + $0x4c] sm:$0xf]
  %v49 = vld [vmem:[%s1 + $0x50] sm:$0xf]
  %v50 = vld [vmem:[%s1 + $0x54] sm:$0xf]
  %v51 = vld [vmem:[%s1 + $0x58] sm:$0xf]
  %v52 = vld [vmem:[%s1 + $0x5c] sm:$0xf]
  %v53 = vld [vmem:[%s1 + $0x60] sm:$0xf]
  %v54 = vld [vmem:[%s1 + $0x64] sm:$0xf]
  %v55 = vld [vmem:[%s1 + $0x68] sm:$0xf]
  %v56 = vld [vmem:[%s1 + $0x6c] sm:$0xf]
  %v57 = vld [vmem:[%s1 + $0x70] sm:$0xf]
  %v58 = vld [vmem:[%s1 + $0x74] sm:$0xf]
  %v59 = vld [vmem:[%s1 + $0x78] sm:$0xf]
  %v60 = vld [vmem:[%s1 + $0x7c] sm:$0xf]
  %v61 = vld [vmem:[%s1 + $0x80] sm:$0xf]
  %v62 = vld [vmem:[%s1 + $0x84] sm:$0xf]
  %v63 = vld [vmem:[%s1 + $0x88] sm:$0xf]
  %v64 = vld [vmem:[%s1 + $0x8c] sm:$0xf]
  %v65 = vld [vmem:[%s1 + $0x90] sm:$0xf]
  %v66 = vld [vmem:[%s1 + $0x94] sm:$0xf]
  %v67 = vld [vmem:[%s1 + $0x98] sm:$0xf]
  %v68 = vld [vmem:[%s1 + $0x9c] sm:$0xf]
  %v69 = vld [vmem:[%s1 + $0xa0] sm:$0xf]
  %v70 = vld [vmem:[%s1 + $0xa4] sm:$0xf]
  %v71 = vld [vmem:[%s1 + $0xa8] sm:$0xf]
  %v72 = vld [vmem:[%s1 + $0xac] sm:$0xf]
  %v73 = vld [vmem:[%s1 + $0xb0] sm:$0xf]
  %v74 = vld [vmem:[%s1 + $0xb4] sm:$0xf]
  %v75 = vld [vmem:[%s1 + $0xb8] sm:$0xf]
  %v76 = vld [vmem:[%s1 + $0xbc] sm:$0xf]
  %v77 = vld [vmem:[%s1 + $0xc0] sm:$0xf]
  %v78 = vld [vmem:[%s1 + $0xc4] sm:$0xf]
  %v79 = vld [vmem:[%s1 + $0xc8] sm:$0xf]
  %v80 = vld [vmem:[%s1 + $0xcc] sm:$0xf]
  %v81 = vld [vmem:[%s1 + $0xd0] sm:$0xf]
  %v82 = vld [vmem:[%s1 + $0xd4] sm:$0xf]
  %v83 = vld [vmem:[%s1 + $0xd8] sm:$0xf]
  %v84 = vld [vmem:[%s1 + $0xdc] sm:$0xf]
  %v85 = vld [vmem:[%s1 + $0xe0] sm:$0xf]
  %v86 = vld [vmem:[%s1 + $0xe4] sm:$0xf]
  %v87 = vld [vmem:[%s1 + $0xe8] sm:$0xf]
  %v88 = vld [vmem:[%s1 + $0xec] sm:$0xf]
  %v89 = vld [vmem:[%s1 + $0xf0] sm:$0xf]
  %v90 = vld [vmem:[%s1 + $0xf4] sm:$0xf]
  %v91 = vld [vmem:[%s1 + $0xf8] sm:$0xf]
  %v92 = vld [vmem:[%s1 + $0xfc] sm:$0xf]
  %v93 = vld [vmem:[%s2] sm:$0x1]
  %v95 = vlaneseq
  %v96 = vshrl.u32 %v95, 7
  %v97 = vsub.s32 0, %v96
  %v98 = vrot.slane %v93, %v97
  %v102 = vunpack.c.l.b16 %v27
  %v103 = vunpack.c.h.b16 %v27
  %v104 = vunpack.c.l.b16 %v28
  %v105 = vunpack.c.h.b16 %v28
  %v106 = vpack.c.b16 %v102, %v102
  %v107 = vpack.c.b16 %v103, %v103
  %v108 = vpack.c.b16 %v104, %v104
  %v109 = vpack.c.b16 %v105, %v105
  %v178 = vunpack.c.l.b16 %v29
  %v179 = vunpack.c.l.b16 %v30
  %v180 = vunpack.c.l.b16 %v31
  %v181 = vunpack.c.l.b16 %v32
  %v182 = vunpack.c.l.b16 %v33
  %v183 = vunpack.c.l.b16 %v34
  %v184 = vunpack.c.l.b16 %v35
  %v185 = vunpack.c.l.b16 %v36
  %v186 = vunpack.c.l.b16 %v37
  %v187 = vunpack.c.l.b16 %v38
  %v188 = vunpack.c.l.b16 %v39
  %v189 = vunpack.c.l.b16 %v40
  %v190 = vunpack.c.l.b16 %v41
  %v191 = vunpack.c.l.b16 %v42
  %v192 = vunpack.c.l.b16 %v43
  %v193 = vunpack.c.l.b16 %v44
  %v194 = vunpack.c.l.b16 %v45
  %v195 = vunpack.c.l.b16 %v46
  %v196 = vunpack.c.l.b16 %v47
  %v197 = vunpack.c.l.b16 %v48
  %v198 = vunpack.c.l.b16 %v49
  %v199 = vunpack.c.l.b16 %v50
  %v200 = vunpack.c.l.b16 %v51
  %v201 = vunpack.c.l.b16 %v52
  %v202 = vunpack.c.l.b16 %v53
  %v203 = vunpack.c.l.b16 %v54
  %v204 = vunpack.c.l.b16 %v55
  %v205 = vunpack.c.l.b16 %v56
  %v206 = vunpack.c.l.b16 %v57
  %v207 = vunpack.c.l.b16 %v58
  %v208 = vunpack.c.l.b16 %v59
  %v209 = vunpack.c.l.b16 %v60
  %v210 = vunpack.c.l.b16 %v61
  %v211 = vunpack.c.l.b16 %v62
  %v212 = vunpack.c.l.b16 %v63
  %v213 = vunpack.c.l.b16 %v64
  %v214 = vunpack.c.l.b16 %v65
  %v215 = vunpack.c.l.b16 %v66
  %v216 = vunpack.c.l.b16 %v67
  %v217 = vunpack.c.l.b16 %v68
  %v218 = vunpack.c.l.b16 %v69
  %v219 = vunpack.c.l.b16 %v70
  %v220 = vunpack.c.l.b16 %v71
  %v221 = vunpack.c.l.b16 %v72
  %v222 = vunpack.c.l.b16 %v73
  %v223 = vunpack.c.l.b16 %v74
  %v224 = vunpack.c.l.b16 %v75
  %v225 = vunpack.c.l.b16 %v76
  %v226 = vunpack.c.l.b16 %v77
  %v227 = vunpack.c.l.b16 %v78
  %v228 = vunpack.c.l.b16 %v79
  %v229 = vunpack.c.l.b16 %v80
  %v230 = vunpack.c.l.b16 %v81
  %v231 = vunpack.c.l.b16 %v82
  %v232 = vunpack.c.l.b16 %v83
  %v233 = vunpack.c.l.b16 %v84
  %v234 = vunpack.c.l.b16 %v85
  %v235 = vunpack.c.l.b16 %v86
  %v236 = vunpack.c.l.b16 %v87
  %v237 = vunpack.c.l.b16 %v88
  %v238 = vunpack.c.l.b16 %v89
  %v239 = vunpack.c.l.b16 %v90
  %v240 = vunpack.c.l.b16 %v91
  %v241 = vunpack.c.l.b16 %v92
  %v242 = vpack.c.b16 %v179, %v178
  %v243 = vpack.c.b16 %v181, %v180
  %v244 = vpack.c.b16 %v183, %v182
  %v245 = vpack.c.b16 %v185, %v184
  %v246 = vpack.c.b16 %v187, %v186
  %v247 = vpack.c.b16 %v189, %v188
  %v248 = vpack.c.b16 %v191, %v190
  %v249 = vpack.c.b16 %v193, %v192
  %v250 = vpack.c.b16 %v195, %v194
  %v251 = vpack.c.b16 %v197, %v196
  %v252 = vpack.c.b16 %v199, %v198
  %v253 = vpack.c.b16 %v201, %v200
  %v254 = vpack.c.b16 %v203, %v202
  %v255 = vpack.c.b16 %v205, %v204
  %v256 = vpack.c.b16 %v207, %v206
  %v257 = vpack.c.b16 %v209, %v208
  %v258 = vpack.c.b16 %v211, %v210
  %v259 = vpack.c.b16 %v213, %v212
  %v260 = vpack.c.b16 %v215, %v214
  %v261 = vpack.c.b16 %v217, %v216
  %v262 = vpack.c.b16 %v219, %v218
  %v263 = vpack.c.b16 %v221, %v220
  %v264 = vpack.c.b16 %v223, %v222
  %v265 = vpack.c.b16 %v225, %v224
  %v266 = vpack.c.b16 %v227, %v226
  %v267 = vpack.c.b16 %v229, %v228
  %v268 = vpack.c.b16 %v231, %v230
  %v269 = vpack.c.b16 %v233, %v232
  %v270 = vpack.c.b16 %v235, %v234
  %v271 = vpack.c.b16 %v237, %v236
  %v272 = vpack.c.b16 %v239, %v238
  %v273 = vpack.c.b16 %v241, %v240
  %306 = vmatprep.subr.bf16.mxu0 0
  %307 = vmatpush1.bf16.msra.mxu0 %v249
  %308 = vmatprep.subr.bf16.mxu0 0
  %309 = vmatpush1.bf16.msra.mxu0 %v248
  %310 = vmatprep.subr.bf16.mxu0 0
  %311 = vmatpush1.bf16.msra.mxu0 %v247
  %312 = vmatprep.subr.bf16.mxu0 0
  %313 = vmatpush1.bf16.msra.mxu0 %v246
  %314 = vmatprep.subr.bf16.mxu0 0
  %315 = vmatpush1.bf16.msra.mxu0 %v245
  %316 = vmatprep.subr.bf16.mxu0 0
  %317 = vmatpush1.bf16.msra.mxu0 %v244
  %318 = vmatprep.subr.bf16.mxu0 0
  %319 = vmatpush1.bf16.msra.mxu0 %v243
  %320 = vmatprep.subr.bf16.mxu0 0
  %321 = vmatpush1.bf16.msra.mxu0 %v242
  %322 = vmatprep.subr.bf16.mxu0 0
  %323 = vmatpush2.bf16.msra.mxu0 %v257
  %324 = vmatprep.subr.bf16.mxu0 0
  %325 = vmatpush2.bf16.msra.mxu0 %v256
  %326 = vmatprep.subr.bf16.mxu0 0
  %327 = vmatpush2.bf16.msra.mxu0 %v255
  %328 = vmatprep.subr.bf16.mxu0 0
  %329 = vmatpush2.bf16.msra.mxu0 %v254
  %330 = vmatprep.subr.bf16.mxu0 0
  %331 = vmatpush2.bf16.msra.mxu0 %v253
  %332 = vmatprep.subr.bf16.mxu0 0
  %333 = vmatpush2.bf16.msra.mxu0 %v252
  %334 = vmatprep.subr.bf16.mxu0 0
  %335 = vmatpush2.bf16.msra.mxu0 %v251
  %336 = vmatprep.subr.bf16.mxu0 0
  %337 = vmatpush2.bf16.msra.mxu0 %v250
  %338 = vmatprep.mubr.bf16.mxu0 %v107
  %339 = vmatmul.mubr.bf16.gmra.mxu0 %v106
  %v340 = vpop.f32.mrf.mxu0
  %v341 = vadd.f32 %v98, %v340
  %v342 = vpop.f32.mrf.mxu0
  %v343 = vpop.f32.mrf.mxu0
  %v344 = vpop.f32.mrf.mxu0
  %345 = vdwg.mxu0
  %346 = vmatprep.subr.bf16.mxu0 0
  %347 = vmatpush1.bf16.msra.mxu0 %v265
  %348 = vmatprep.subr.bf16.mxu0 0
  %349 = vmatpush1.bf16.msra.mxu0 %v264
  %350 = vmatprep.subr.bf16.mxu0 0
  %351 = vmatpush1.bf16.msra.mxu0 %v263
  %352 = vmatprep.subr.bf16.mxu0 0
  %353 = vmatpush1.bf16.msra.mxu0 %v262
  %354 = vmatprep.subr.bf16.mxu0 0
  %355 = vmatpush1.bf16.msra.mxu0 %v261
  %356 = vmatprep.subr.bf16.mxu0 0
  %357 = vmatpush1.bf16.msra.mxu0 %v260
  %358 = vmatprep.subr.bf16.mxu0 0
  %359 = vmatpush1.bf16.msra.mxu0 %v259
  %360 = vmatprep.subr.bf16.mxu0 0
  %361 = vmatpush1.bf16.msra.mxu0 %v258
  %362 = vmatprep.subr.bf16.mxu0 0
  %363 = vmatpush2.bf16.msra.mxu0 %v273
  %364 = vmatprep.subr.bf16.mxu0 0
  %365 = vmatpush2.bf16.msra.mxu0 %v272
  %366 = vmatprep.subr.bf16.mxu0 0
  %367 = vmatpush2.bf16.msra.mxu0 %v271
  %368 = vmatprep.subr.bf16.mxu0 0
  %369 = vmatpush2.bf16.msra.mxu0 %v270
  %370 = vmatprep.subr.bf16.mxu0 0
  %371 = vmatpush2.bf16.msra.mxu0 %v269
  %372 = vmatprep.subr.bf16.mxu0 0
  %373 = vmatpush2.bf16.msra.mxu0 %v268
  %374 = vmatprep.subr.bf16.mxu0 0
  %375 = vmatpush2.bf16.msra.mxu0 %v267
  %376 = vmatprep.subr.bf16.mxu0 0
  %377 = vmatpush2.bf16.msra.mxu0 %v266
  %378 = vmatprep.mubr.bf16.mxu0 %v109
  %379 = vmatmul.mubr.bf16.gmra.mxu0 %v108
  %v380 = vpop.f32.mrf.mxu0
  %v381 = vadd.f32 %v341, %v380
  %v382 = vpop.f32.mrf.mxu0
  %v383 = vpop.f32.mrf.mxu0
  %v384 = vpop.f32.mrf.mxu0
  %385 = vdwg.mxu0
  %v386 = vpack.c.bf16 %v381, %v381
  %v387 = vld [vmem:[%s3] sm:$0xf]
  %v388 = vld [vmem:[%s3 + $0x4] sm:$0xf]
  %v389 = vld [vmem:[%s3 + $0x8] sm:$0xf]
  %v390 = vld [vmem:[%s3 + $0xc] sm:$0xf]
  %v391 = vld [vmem:[%s3 + $0x10] sm:$0xf]
  %v392 = vld [vmem:[%s3 + $0x14] sm:$0xf]
  %v393 = vld [vmem:[%s3 + $0x18] sm:$0xf]
  %v394 = vld [vmem:[%s3 + $0x1c] sm:$0xf]
  %v395 = vld [vmem:[%s3 + $0x20] sm:$0xf]
  %v396 = vld [vmem:[%s3 + $0x24] sm:$0xf]
  %v397 = vld [vmem:[%s3 + $0x28] sm:$0xf]
  %v398 = vld [vmem:[%s3 + $0x2c] sm:$0xf]
  %v399 = vld [vmem:[%s3 + $0x30] sm:$0xf]
  %v400 = vld [vmem:[%s3 + $0x34] sm:$0xf]
  %v401 = vld [vmem:[%s3 + $0x38] sm:$0xf]
  %v402 = vld [vmem:[%s3 + $0x3c] sm:$0xf]
  %v403 = vld [vmem:[%s4] sm:$0x1]
  %v405 = vlaneseq
  %v406 = vshrl.u32 %v405, 7
  %v407 = vsub.s32 0, %v406
  %v408 = vrot.slane %v403, %v407
  %v426 = vunpack.c.l.b16 %v387
  %v427 = vunpack.c.l.b16 %v388
  %v428 = vunpack.c.l.b16 %v389
  %v429 = vunpack.c.l.b16 %v390
  %v430 = vunpack.c.l.b16 %v391
  %v431 = vunpack.c.l.b16 %v392
  %v432 = vunpack.c.l.b16 %v393
  %v433 = vunpack.c.l.b16 %v394
  %v434 = vunpack.c.l.b16 %v395
  %v435 = vunpack.c.l.b16 %v396
  %v436 = vunpack.c.l.b16 %v397
  %v437 = vunpack.c.l.b16 %v398
  %v438 = vunpack.c.l.b16 %v399
  %v439 = vunpack.c.l.b16 %v400
  %v440 = vunpack.c.l.b16 %v401
  %v441 = vunpack.c.l.b16 %v402
  %v442 = vpack.c.b16 %v427, %v426
  %v443 = vpack.c.b16 %v429, %v428
  %v444 = vpack.c.b16 %v431, %v430
  %v445 = vpack.c.b16 %v433, %v432
  %v446 = vpack.c.b16 %v435, %v434
  %v447 = vpack.c.b16 %v437, %v436
  %v448 = vpack.c.b16 %v439, %v438
  %v449 = vpack.c.b16 %v441, %v440
  %458 = vmatprep.subr.bf16.mxu0 0
  %459 = vmatpush1.bf16.msra.mxu0 %v449
  %460 = vmatprep.subr.bf16.mxu0 0
  %461 = vmatpush1.bf16.msra.mxu0 %v448
  %462 = vmatprep.subr.bf16.mxu0 0
  %463 = vmatpush1.bf16.msra.mxu0 %v447
  %464 = vmatprep.subr.bf16.mxu0 0
  %465 = vmatpush1.bf16.msra.mxu0 %v446
  %466 = vmatprep.subr.bf16.mxu0 0
  %467 = vmatpush1.bf16.msra.mxu0 %v445
  %468 = vmatprep.subr.bf16.mxu0 0
  %469 = vmatpush1.bf16.msra.mxu0 %v444
  %470 = vmatprep.subr.bf16.mxu0 0
  %471 = vmatpush1.bf16.msra.mxu0 %v443
  %472 = vmatprep.subr.bf16.mxu0 0
  %473 = vmatpush1.bf16.msra.mxu0 %v442
  %474 = vmatprep.subr.bf16.mxu0 0
  %475 = vmatpush2.bf16.msra.mxu0 0
  %476 = vmatprep.subr.bf16.mxu0 0
  %477 = vmatpush2.bf16.msra.mxu0 0
  %478 = vmatprep.subr.bf16.mxu0 0
  %479 = vmatpush2.bf16.msra.mxu0 0
  %480 = vmatprep.subr.bf16.mxu0 0
  %481 = vmatpush2.bf16.msra.mxu0 0
  %482 = vmatprep.subr.bf16.mxu0 0
  %483 = vmatpush2.bf16.msra.mxu0 0
  %484 = vmatprep.subr.bf16.mxu0 0
  %485 = vmatpush2.bf16.msra.mxu0 0
  %486 = vmatprep.subr.bf16.mxu0 0
  %487 = vmatpush2.bf16.msra.mxu0 0
  %488 = vmatprep.subr.bf16.mxu0 0
  %489 = vmatpush2.bf16.msra.mxu0 0
  %490 = vmatprep.mubr.bf16.mxu0 0
  %491 = vmatmul.mubr.bf16.gmra.mxu0 %v386
  %v492 = vpop.f32.mrf.mxu0
  %v493 = vadd.f32 %v408, %v492
  %v494 = vpop.f32.mrf.mxu0
  %v495 = vpop.f32.mrf.mxu0
  %v496 = vpop.f32.mrf.mxu0
  %497 = vdwg.mxu0
  %v498 = vpack.c.bf16 %v493, %v493
  %v499 = vld [vmem:[%s5] sm:$0xf]
  %v500 = vld [vmem:[%s5 + $0x4] sm:$0xf]
  %v501 = vld [vmem:[%s5 + $0x8] sm:$0xf]
  %v502 = vld [vmem:[%s5 + $0xc] sm:$0xf]
  %v503 = vld [vmem:[%s5 + $0x10] sm:$0xf]
  %v504 = vld [vmem:[%s5 + $0x14] sm:$0xf]
  %v505 = vld [vmem:[%s5 + $0x18] sm:$0xf]
  %v506 = vld [vmem:[%s5 + $0x1c] sm:$0xf]
  %v507 = vld [vmem:[%s5 + $0x20] sm:$0xf]
  %v508 = vld [vmem:[%s5 + $0x24] sm:$0xf]
  %v509 = vld [vmem:[%s5 + $0x28] sm:$0xf]
  %v510 = vld [vmem:[%s5 + $0x2c] sm:$0xf]
  %v511 = vld [vmem:[%s5 + $0x30] sm:$0xf]
  %v512 = vld [vmem:[%s5 + $0x34] sm:$0xf]
  %v513 = vld [vmem:[%s5 + $0x38] sm:$0xf]
  %v514 = vld [vmem:[%s5 + $0x3c] sm:$0xf]
  %v515 = vld [vmem:[%s6] sm:$0x1]
  %v517 = vlaneseq
  %v518 = vshrl.u32 %v517, 7
  %v519 = vsub.s32 0, %v518
  %v520 = vrot.slane %v515, %v519
  %v538 = vunpack.c.l.b16 %v499
  %v539 = vunpack.c.l.b16 %v500
  %v540 = vunpack.c.l.b16 %v501
  %v541 = vunpack.c.l.b16 %v502
  %v542 = vunpack.c.l.b16 %v503
  %v543 = vunpack.c.l.b16 %v504
  %v544 = vunpack.c.l.b16 %v505
  %v545 = vunpack.c.l.b16 %v506
  %v546 = vunpack.c.l.b16 %v507
  %v547 = vunpack.c.l.b16 %v508
  %v548 = vunpack.c.l.b16 %v509
  %v549 = vunpack.c.l.b16 %v510
  %v550 = vunpack.c.l.b16 %v511
  %v551 = vunpack.c.l.b16 %v512
  %v552 = vunpack.c.l.b16 %v513
  %v553 = vunpack.c.l.b16 %v514
  %v554 = vpack.c.b16 %v539, %v538
  %v555 = vpack.c.b16 %v541, %v540
  %v556 = vpack.c.b16 %v543, %v542
  %v557 = vpack.c.b16 %v545, %v544
  %v558 = vpack.c.b16 %v547, %v546
  %v559 = vpack.c.b16 %v549, %v548
  %v560 = vpack.c.b16 %v551, %v550
  %v561 = vpack.c.b16 %v553, %v552
  %570 = vmatprep.subr.bf16.mxu0 0
  %571 = vmatpush1.bf16.msra.mxu0 %v561
  %572 = vmatprep.subr.bf16.mxu0 0
  %573 = vmatpush1.bf16.msra.mxu0 %v560
  %574 = vmatprep.subr.bf16.mxu0 0
  %575 = vmatpush1.bf16.msra.mxu0 %v559
  %576 = vmatprep.subr.bf16.mxu0 0
  %577 = vmatpush1.bf16.msra.mxu0 %v558
  %578 = vmatprep.subr.bf16.mxu0 0
  %579 = vmatpush1.bf16.msra.mxu0 %v557
  %580 = vmatprep.subr.bf16.mxu0 0
  %581 = vmatpush1.bf16.msra.mxu0 %v556
  %582 = vmatprep.subr.bf16.mxu0 0
  %583 = vmatpush1.bf16.msra.mxu0 %v555
  %584 = vmatprep.subr.bf16.mxu0 0
  %585 = vmatpush1.bf16.msra.mxu0 %v554
  %586 = vmatprep.subr.bf16.mxu0 0
  %587 = vmatpush2.bf16.msra.mxu0 0
  %588 = vmatprep.subr.bf16.mxu0 0
  %589 = vmatpush2.bf16.msra.mxu0 0
  %590 = vmatprep.subr.bf16.mxu0 0
  %591 = vmatpush2.bf16.msra.mxu0 0
  %592 = vmatprep.subr.bf16.mxu0 0
  %593 = vmatpush2.bf16.msra.mxu0 0
  %594 = vmatprep.subr.bf16.mxu0 0
  %595 = vmatpush2.bf16.msra.mxu0 0
  %596 = vmatprep.subr.bf16.mxu0 0
  %597 = vmatpush2.bf16.msra.mxu0 0
  %598 = vmatprep.subr.bf16.mxu0 0
  %599 = vmatpush2.bf16.msra.mxu0 0
  %600 = vmatprep.subr.bf16.mxu0 0
  %601 = vmatpush2.bf16.msra.mxu0 0
  %602 = vmatprep.mubr.bf16.mxu0 0
  %603 = vmatmul.mubr.bf16.gmra.mxu0 %v498
  %v604 = vpop.f32.mrf.mxu0
  %v605 = vadd.f32 %v520, %v604
  %v606 = vpop.f32.mrf.mxu0
  %v607 = vpop.f32.mrf.mxu0
  %v608 = vpop.f32.mrf.mxu0
  %609 = vdwg.mxu0
  %610 = vst [vmem:[%s7] sm:$0xff] %v605
  // Predicated region
  $region30: #{lenet_forward.5} parent=0 // pred_check
    _
  $region31: #{lenet_forward.5} parent=0 // pred_check_branch
    %612 = sbr.rel (0) target = $region33
  $region32: #{lenet_forward.5} parent=0 // pred_region
    _
  $region33: #{lenet_forward.5} parent=0 // pred_fallthru
    _
  // Predicated region
  $region34: #{lenet_forward.5} parent=0 // pred_check
    _
  $region35: #{lenet_forward.5} parent=0 // pred_check_branch
    %614 = sbr.rel (0) target = $region37
  $region36: #{lenet_forward.5} parent=0 // pred_region
    _
  $region37: #{lenet_forward.5} parent=0 // pred_fallthru
    _

</llo_original>
